<compile_context>
chip_gen: v7x
topology: tpu7x:2x2x1
jax: 0.10.0
libtpu: 0.0.40
codegen_flags: <defaults>
</compile_context>

<pallas_src>
import functools
import jax
import jax.numpy as jnp
from jax.experimental import pallas as pl
from jax.experimental.pallas import tpu as pltpu


def _round_up(x, m):
    return ((x + m - 1) // m) * m


@functools.lru_cache(maxsize=1)
def _vmem_limit_bytes():
    # v5e/v6e: 128 MiB physical VMEM; v7x: 64 MiB.  Default conservatively to
    # the v7x figure if the query is unavailable.
    cap = 64 * 1024 * 1024
    try:
        cap = int(getattr(pltpu.get_tpu_info(), "vmem_capacity_bytes", cap))
    except Exception:
        pass
    return int(min(max(cap * 3 // 4, 32 * 1024 * 1024), 96 * 1024 * 1024))


# ----------------------------------------------------------------------------
# Plain-JAX glue: FPS / ball query / gathers (index math, not the hot path)
# ----------------------------------------------------------------------------
def square_distance(src, dst):
    # src [B,N,C], dst [B,M,C] -> [B,N,M]
    dist = -2.0 * jnp.einsum("bnc,bmc->bnm", src, dst)
    dist = dist + jnp.sum(src ** 2, -1)[:, :, None]
    dist = dist + jnp.sum(dst ** 2, -1)[:, None, :]
    return dist


def index_points(points, idx):
    # points [B,N,C], idx [B, ...] -> [B, ..., C]
    B = points.shape[0]
    batch = jnp.arange(B, dtype=idx.dtype).reshape((B,) + (1,) * (idx.ndim - 1))
    return points[batch, idx]


def farthest_point_sample(xyz, npoint, key):
    # xyz [B,N,3] -> centroids [B, npoint] int32
    B, N, _ = xyz.shape
    farthest0 = jax.random.randint(key, (B,), 0, N, dtype=jnp.int32)

    def body(i, state):
        distance, farthest, centroids = state
        centroids = centroids.at[:, i].set(farthest)
        centroid = jnp.take_along_axis(xyz, farthest[:, None, None], axis=1)  # [B,1,3]
        dist = jnp.sum((xyz - centroid) ** 2, -1)                              # [B,N]
        distance = jnp.minimum(distance, dist)
        farthest = jnp.argmax(distance, axis=-1).astype(jnp.int32)
        return distance, farthest, centroids

    distance = jnp.full((B, N), 1e10, jnp.float32)
    centroids = jnp.zeros((B, npoint), jnp.int32)
    _, _, centroids = jax.lax.fori_loop(0, npoint, body, (distance, farthest0, centroids))
    return centroids


def query_ball_point(radius, nsample, xyz, new_xyz):
    # xyz [B,N,3], new_xyz [B,S,3] -> [B,S,nsample] int32
    # NOTE: for an empty ball, index N is clamped to N-1 by JAX gather, whereas
    # the PyTorch reference would index out of bounds (glue-code edge case).
    B, N, _ = xyz.shape
    S = new_xyz.shape[1]
    sqrdists = square_distance(new_xyz, xyz)                       # [B,S,N]
    group_idx = jnp.broadcast_to(jnp.arange(N, dtype=jnp.int32), (B, S, N))
    group_idx = jnp.where(sqrdists > radius ** 2, N, group_idx)
    group_idx = jnp.sort(group_idx, axis=-1)[:, :, :nsample]
    group_first = jnp.broadcast_to(group_idx[:, :, :1], group_idx.shape)
    group_idx = jnp.where(group_idx == N, group_first, group_idx)
    return group_idx


# ----------------------------------------------------------------------------
# Pallas kernels
# ----------------------------------------------------------------------------
def _make_layer_kernel(apply_prenorm, is_last, kb, tile, bs_real, needs_mask):
    """One fused pass over a (r, kt) block of the grouped activations:
       [prev-layer folded BN scale/shift + ReLU] -> bf16 MXU matmul (f32 acc)
       -> BN sum/sumsq accumulation across the "arbitrary" K grid axis
       -> inner layers: store bf16 activations;
          last layer: accumulate per-row max/min over K (no full write)."""

    def kernel(*refs):
        i = 0
        x_ref = refs[i]; i += 1
        if apply_prenorm:
            ss_ref = refs[i]; i += 1
        w_ref = refs[i]; i += 1
        if is_last:
            stats_ref, ymax_ref, ymin_ref = refs[i], refs[i + 1], refs[i + 2]
        else:
            y_ref, stats_ref = refs[i], refs[i + 1]

        r = pl.program_id(0)
        kt = pl.program_id(1)

        cin = x_ref.shape[-1]
        # Fold the Kb neighbor slices into the matmul M dim (tile % 8 == 0, so
        # this is a sublane-aligned, copy-free collapse).
        x = x_ref[...].reshape(kb * tile, cin)
        if apply_prenorm:
            ss = ss_ref[...]                                        # [2, cin]
            x = jnp.maximum(x.astype(jnp.float32) * ss[0:1, :] + ss[1:2, :], 0.0)

        # 1x1 Conv2d == matmul over channels; bf16 operands, f32 accumulate.
        y = jnp.dot(x.astype(jnp.bfloat16), w_ref[...],
                    preferred_element_type=jnp.float32)             # [kb*tile, cout_p]
        cout = y.shape[-1]
        y3 = y.reshape(kb, tile, cout)

        # Single-pass batch stats (sum, sum-of-squares) over the real rows
        # only, from the f32 y (before any bf16 cast); accumulated over kt.
        if needs_mask:
            valid = (jax.lax.broadcasted_iota(jnp.int32, (1, tile, 1), 1)
                     + r * tile) < bs_real
            ys = jnp.where(valid, y3, 0.0)
        else:
            ys = y3
        s1 = jnp.sum(jnp.sum(ys, axis=0), axis=0)
        s2 = jnp.sum(jnp.sum(ys * ys, axis=0), axis=0)
        upd = jnp.stack([s1, s2])[None]                             # [1,2,cout]

        @pl.when(kt == 0)
        def _():
            stats_ref[...] = upd

        @pl.when(kt != 0)
        def _():
            stats_ref[...] = stats_ref[...] + upd

        if is_last:
            # max_K relu(a*y+b) commutes through the folded BN per channel
            # (max for a>=0, min for a<0) -> only per-row max/min are needed.
            blk_max = jnp.max(y3, axis=0)                           # [tile, cout]
            blk_min = jnp.min(y3, axis=0)

            @pl.when(kt == 0)
            def _():
                ymax_ref[...] = blk_max
                ymin_ref[...] = blk_min

            @pl.when(kt != 0)
            def _():
                ymax_ref[...] = jnp.maximum(ymax_ref[...], blk_max)
                ymin_ref[...] = jnp.minimum(ymin_ref[...], blk_min)
        else:
            # Inter-layer activations in bf16 (halves HBM write+read traffic).
            y_ref[...] = y3.astype(jnp.bfloat16)

    return kernel


def _finalize_kernel(ymax_ref, ymin_ref, ss_ref, o_ref):
    """Apply the last layer's folded BN scale/shift + ReLU to the per-channel
       max_K y / min_K y, selected by sign(scale); lane-dense output."""
    ss = ss_ref[...]
    scale = ss[0:1, :]
    shift = ss[1:2, :]
    y = jnp.where(scale >= 0.0, ymax_ref[...], ymin_ref[...])
    o_ref[...] = jnp.maximum(y * scale + shift, 0.0)


# ----------------------------------------------------------------------------
# Per-scale MLP wrapper
# ----------------------------------------------------------------------------
def _pick_kb(K, tile, cin_p, cout_p, in_bytes, budget_bytes):
    """Largest divisor of K keeping the double-buffered in+out activation
       blocks within the VMEM budget."""
    per_row = cin_p * in_bytes + cout_p * 2
    max_rows = max(tile, budget_bytes // (2 * max(per_row, 1)))
    kb = 1
    for d in range(2, K + 1):
        if K % d == 0 and d * tile <= max_rows:
            kb = d
    return kb


def pallas_msg_scale(grouped, layer_params, eps=1e-5):
    """grouped: [K, B*S, C0] f32, neighbor-major, channels-last.
       Returns [B*S, C_last] = max_K relu(bn(conv(...))) (training-mode BN)."""
    K, BS, C0 = grouped.shape
    n_layers = len(layer_params)

    # Row tiling: TILE multiple of 8, pad B*S to a multiple of TILE.
    TILE = min(512, _round_up(BS, 8))
    BSp = _round_up(BS, TILE)
    R = BSp // TILE
    needs_mask = BSp != BS
    n_real = float(K * BS)

    vmem_limit = _vmem_limit_bytes()
    block_budget = vmem_limit // 3
    cparams = pltpu.CompilerParams(
        dimension_semantics=("parallel", "arbitrary"),
        vmem_limit_bytes=vmem_limit)

    # First-layer input: pad channels only to a sublane multiple of 8 (NOT to
    # 128 lanes) — C0 = D+3 is tiny and a 128-lane pad inflates layer-1 reads.
    cin_p = _round_up(C0, 8)
    if cin_p != C0 or BSp != BS:
        x = jnp.pad(grouped, ((0, 0), (0, BSp - BS), (0, cin_p - C0)))
    else:
        x = grouped
    x_bytes = 4                       # f32 first-layer input; bf16 afterwards

    scale_shift = None
    ymax = ymin = None
    c_last = C0
    cout_p_last = cin_p
    for li, (w, b, g, bt) in enumerate(layer_params):
        is_last = li == n_layers - 1
        cin, cout = w.shape
        cout_p = _round_up(cout, 128)
        # Conv bias `b` dropped on purpose: exactly cancelled by training-mode
        # BN mean subtraction (not valid for eval-mode running stats).
        wp = jnp.zeros((cin_p, cout_p), jnp.bfloat16).at[:cin, :cout].set(
            w.astype(jnp.bfloat16))

        Kb = _pick_kb(K, TILE, cin_p, cout_p, x_bytes, block_budget)
        KT = K // Kb

        inputs = [x]
        in_specs = [pl.BlockSpec((Kb, TILE, cin_p), lambda r, kt: (kt, r, 0))]
        if scale_shift is not None:
            inputs.append(scale_shift)
            in_specs.append(pl.BlockSpec((2, cin_p), lambda r, kt: (0, 0)))
        inputs.append(wp)
        in_specs.append(pl.BlockSpec((cin_p, cout_p), lambda r, kt: (0, 0)))

        kern = _make_layer_kernel(scale_shift is not None, is_last,
                                  Kb, TILE, BS, needs_mask)
        stats_spec = pl.BlockSpec((1, 2, cout_p), lambda r, kt: (r, 0, 0))
        stats_shape = jax.ShapeDtypeStruct((R, 2, cout_p), jnp.float32)

        if is_last:
            rowred_spec = pl.BlockSpec((TILE, cout_p), lambda r, kt: (r, 0))
            rowred_shape = jax.ShapeDtypeStruct((BSp, cout_p), jnp.float32)
            stats, ymax, ymin = pl.pallas_call(
                kern, grid=(R, KT),
                in_specs=in_specs,
                out_specs=[stats_spec, rowred_spec, rowred_spec],
                out_shape=[stats_shape, rowred_shape, rowred_shape],
                compiler_params=cparams,
            )(*inputs)
        else:
            y, stats = pl.pallas_call(
                kern, grid=(R, KT),
                in_specs=in_specs,
                out_specs=[pl.BlockSpec((Kb, TILE, cout_p),
                                        lambda r, kt: (kt, r, 0)),
                           stats_spec],
                out_shape=[jax.ShapeDtypeStruct((K, BSp, cout_p), jnp.bfloat16),
                           stats_shape],
                compiler_params=cparams,
            )(*inputs)

        # Finish training-mode BN stats (tiny [2, C] math) and fold gamma/beta
        # into a per-channel scale/shift applied in the NEXT kernel pass.
        sums = jnp.sum(stats, axis=0)                              # [2, cout_p]
        mean = sums[0] / n_real
        var = jnp.maximum(sums[1] / n_real - mean * mean, 0.0)
        gp = jnp.zeros((cout_p,), jnp.float32).at[:cout].set(g)
        bp = jnp.zeros((cout_p,), jnp.float32).at[:cout].set(bt)
        scale = gp * jax.lax.rsqrt(var + eps)
        shift = bp - mean * scale
        scale_shift = jnp.stack([scale, shift])                    # [2, cout_p]

        if not is_last:
            x = y
            x_bytes = 2
            cin_p = cout_p
        c_last = cout
        cout_p_last = cout_p

    # Finalize on the small [BSp, cout_p] max/min tensors (no re-read of the
    # full [K, BSp, cout_p] last-layer activations).
    out = pl.pallas_call(
        _finalize_kernel,
        grid=(R,),
        in_specs=[pl.BlockSpec((TILE, cout_p_last), lambda r: (r, 0)),
                  pl.BlockSpec((TILE, cout_p_last), lambda r: (r, 0)),
                  pl.BlockSpec((2, cout_p_last), lambda r: (0, 0))],
        out_specs=pl.BlockSpec((TILE, cout_p_last), lambda r: (r, 0)),
        out_shape=jax.ShapeDtypeStruct((BSp, cout_p_last), jnp.float32),
        compiler_params=pltpu.CompilerParams(
            dimension_semantics=("parallel",),
            vmem_limit_bytes=vmem_limit),
    )(ymax, ymin, scale_shift)

    return out[:BS, :c_last]                                       # [BS, C_last]


# Pure-JAX reference for the same per-scale math (used for a numerics check).
def _ref_msg_scale(grouped, layer_params, eps=1e-5):
    K, BS, C0 = grouped.shape
    x = grouped.reshape(K * BS, C0)
    for (w, b, g, bt) in layer_params:
        y = jnp.dot(x.astype(jnp.bfloat16), w.astype(jnp.bfloat16),
                    preferred_element_type=jnp.float32) + b
        mean = jnp.mean(y, axis=0)
        var = jnp.mean((y - mean) ** 2, axis=0)
        y = (y - mean) * jax.lax.rsqrt(var + eps) * g + bt
        x = jnp.maximum(y, 0.0)
    return jnp.max(x.reshape(K, BS, -1), axis=0)


# ----------------------------------------------------------------------------
# Module forward
# ----------------------------------------------------------------------------
def _group_scale_inputs(xyz_t, points_t, new_xyz, radius, K):
    """Gather directly into neighbor-major, channels-last [K, B*S, C0]."""
    B = xyz_t.shape[0]
    S = new_xyz.shape[1]
    group_idx = query_ball_point(radius, K, xyz_t, new_xyz)        # [B,S,K]
    idx_km = jnp.transpose(group_idx, (2, 0, 1))                   # [K,B,S] (tiny)
    batch = jnp.arange(B, dtype=group_idx.dtype)[None, :, None]
    grouped_xyz = xyz_t[batch, idx_km] - new_xyz[None]             # [K,B,S,3]
    if points_t is not None:
        grouped = jnp.concatenate([points_t[batch, idx_km], grouped_xyz], axis=-1)
    else:
        grouped = grouped_xyz
    return grouped.reshape(K, B * S, grouped.shape[-1])


def pointnet_sa_msg_forward(xyz, points, params, npoint, radius_list,
                            nsample_list, fps_key, use_pallas=True):
    """
    xyz:    [B, 3, N]  (PyTorch layout)
    points: [B, D, N]  or None
    returns new_xyz [B, 3, S], new_points_concat [B, sum(mlp[-1]), S]
    """
    xyz_t = jnp.transpose(xyz, (0, 2, 1))                          # [B,N,3]
    points_t = jnp.transpose(points, (0, 2, 1)) if points is not None else None
    B = xyz_t.shape[0]
    S = npoint

    fps_idx = farthest_point_sample(xyz_t, S, fps_key)
    new_xyz = index_points(xyz_t, fps_idx)                         # [B,S,3]

    new_points_list = []
    for i, radius in enumerate(radius_list):
        K = nsample_list[i]
        grouped = _group_scale_inputs(xyz_t, points_t, new_xyz, radius, K)
        if use_pallas:
            feat = pallas_msg_scale(grouped, params[i])            # [B*S, C_last]
        else:
            feat = _ref_msg_scale(grouped, params[i])
        feat = feat.reshape(B, S, -1)
        new_points_list.append(jnp.transpose(feat, (0, 2, 1)))     # [B,C_last,S]

    new_xyz_out = jnp.transpose(new_xyz, (0, 2, 1))                # [B,3,S]
    new_points_concat = jnp.concatenate(new_points_list, axis=1)
    return new_xyz_out, new_points_concat


# ----------------------------------------------------------------------------
# Deterministic parameter init (shapes from __init__)
# ----------------------------------------------------------------------------
def init_params(key, in_channel, mlp_list):
    params = []
    for mlp in mlp_list:
        last = in_channel + 3
        layers = []
        for out_c in mlp:
            key, k1, k2, k3, k4 = jax.random.split(key, 5)
            bound = float(last) ** -0.5
            w = jax.random.uniform(k1, (last, out_c), jnp.float32, -bound, bound)   # Conv2d 1x1 weight.T
            b = jax.random.uniform(k2, (out_c,), jnp.float32, -bound, bound)        # Conv2d bias
            g = 1.0 + 0.1 * jax.random.normal(k3, (out_c,), jnp.float32)            # BN gamma
            bt = 0.1 * jax.random.normal(k4, (out_c,), jnp.float32)                 # BN beta
            layers.append((w, b, g, bt))
            last = out_c
        params.append(layers)
    return params


if __name__ == "__main__":
    key = jax.random.PRNGKey(0)
    kx, kp, kw, kf = jax.random.split(key, 4)

    B, N, D = 2, 32, 4
    npoint = 8
    radius_list = [0.5, 1.0]
    nsample_list = [4, 8]
    mlp_list = [[8, 16], [16, 32]]
    in_channel = D

    xyz = jax.random.normal(kx, (B, 3, N), jnp.float32)
    points = jax.random.normal(kp, (B, D, N), jnp.float32)
    params = init_params(kw, in_channel, mlp_list)

    fwd = jax.jit(
        functools.partial(
            pointnet_sa_msg_forward,
            npoint=npoint,
            radius_list=radius_list,
            nsample_list=nsample_list,
            fps_key=kf,
            use_pallas=True,
        )
    )
    new_xyz, new_points = fwd(xyz, points, params)
    jax.block_until_ready((new_xyz, new_points))

    assert new_xyz.shape == (B, 3, npoint)
    assert new_points.shape == (B, sum(m[-1] for m in mlp_list), npoint)
    assert bool(jnp.all(jnp.isfinite(new_points)))

    # Numerics check against a pure-JAX reference of the same forward
    # (slightly looser tolerance: bf16 inter-layer activation storage).
    ref_xyz, ref_points = pointnet_sa_msg_forward(
        xyz, points, params, npoint=npoint, radius_list=radius_list,
        nsample_list=nsample_list, fps_key=kf, use_pallas=False)
    assert bool(jnp.allclose(new_xyz, ref_xyz, atol=1e-5, rtol=1e-5))
    assert bool(jnp.allclose(new_points, ref_points, atol=1e-1, rtol=1e-1))

    print("KERNEL_OK")
</pallas_src>

<mosaic_0001>
module attributes {stable_mosaic.version = 11 : i64} {
  func.func @kernel(%arg0: i32, %arg1: i32, %arg2: memref<4x16x8xf32, #tpu.memory_space<vmem>>, %arg3: memref<8x128xbf16, #tpu.memory_space<vmem>>, %arg4: memref<4x16x128xbf16, #tpu.memory_space<vmem>>, %arg5: memref<1x2x128xf32, #tpu.memory_space<vmem>>) attributes {dimension_semantics = [#tpu.dimension_semantics<parallel>, #tpu.dimension_semantics<arbitrary>], iteration_bounds = array<i64: 1, 1>, scalar_prefetch = 0 : i64, scratch_operands = 0 : i64, tpu.core_type = #tpu.core_type<tc>, window_params = [{transform_indices = @transform_0, window_bounds = array<i64: 4, 16, 8>}, {pipeline_mode = #tpu.pipeline_mode<synchronous>, transform_indices = @transform_1, window_bounds = array<i64: 8, 128>}, {transform_indices = @transform_2, window_bounds = array<i64: 4, 16, 128>}, {transform_indices = @transform_3, window_bounds = array<i64: 1, 2, 128>}]} {
    %c0 = arith.constant 0 : index
    %c0_0 = arith.constant 0 : index
    %c0_1 = arith.constant 0 : index
    %0 = vector.load %arg2[%c0, %c0_0, %c0_1] : memref<4x16x8xf32, #tpu.memory_space<vmem>>, vector<4x16x8xf32>
    %1 = vector.shape_cast %0 : vector<4x16x8xf32> to vector<64x8xf32>
    %2 = arith.truncf %1 : vector<64x8xf32> to vector<64x8xbf16>
    %c0_2 = arith.constant 0 : index
    %c0_3 = arith.constant 0 : index
    %3 = vector.load %arg3[%c0_2, %c0_3] : memref<8x128xbf16, #tpu.memory_space<vmem>>, vector<8x128xbf16>
    %cst = arith.constant dense<0.000000e+00> : vector<64x128xf32>
    %4 = tpu.matmul %2, %3, %cst {dimension_numbers = #tpu.dot_dimension_numbers<[1], [0], [0], [1], [0, 0, 1, 1], [], []>} : vector<64x8xbf16>, vector<8x128xbf16>, vector<64x128xf32> -> vector<64x128xf32>
    %5 = vector.shape_cast %4 : vector<64x128xf32> to vector<4x16x128xf32>
    %cst_4 = arith.constant dense<0.000000e+00> : vector<16x128xf32>
    %6 = vector.multi_reduction <add>, %5, %cst_4 [0] : vector<4x16x128xf32> to vector<16x128xf32>
    %cst_5 = arith.constant dense<0.000000e+00> : vector<128xf32>
    %7 = vector.multi_reduction <add>, %6, %cst_5 [0] : vector<16x128xf32> to vector<128xf32>
    %8 = arith.mulf %5, %5 : vector<4x16x128xf32>
    %cst_6 = arith.constant dense<0.000000e+00> : vector<16x128xf32>
    %9 = vector.multi_reduction <add>, %8, %cst_6 [0] : vector<4x16x128xf32> to vector<16x128xf32>
    %cst_7 = arith.constant dense<0.000000e+00> : vector<128xf32>
    %10 = vector.multi_reduction <add>, %9, %cst_7 [0] : vector<16x128xf32> to vector<128xf32>
    %11 = vector.shape_cast %7 : vector<128xf32> to vector<1x128xf32>
    %12 = vector.shape_cast %10 : vector<128xf32> to vector<1x128xf32>
    %13 = tpu.concatenate %11, %12 in 0 : vector<1x128xf32>, vector<1x128xf32> -> vector<2x128xf32>
    %14 = vector.shape_cast %13 : vector<2x128xf32> to vector<1x2x128xf32>
    %c0_i32 = arith.constant 0 : i32
    %15 = arith.cmpi eq, %arg1, %c0_i32 : i32
    %16 = arith.extui %15 : i1 to i32
    %c0_i32_8 = arith.constant 0 : i32
    %17 = arith.cmpi ne, %16, %c0_i32_8 : i32
    scf.if %17 {
      %c0_14 = arith.constant 0 : index
      %c0_15 = arith.constant 0 : index
      %c0_16 = arith.constant 0 : index
      %23 = vector.load %arg5[%c0_14, %c0_15, %c0_16] : memref<1x2x128xf32, #tpu.memory_space<vmem>>, vector<1x2x128xf32>
      tpu.vector_store %arg5[%c0_14, %c0_15, %c0_16], %14 {strides = array<i32>} : memref<1x2x128xf32, #tpu.memory_space<vmem>>, vector<1x2x128xf32>,
    } else {
    }
    %c0_i32_9 = arith.constant 0 : i32
    %18 = arith.cmpi ne, %arg1, %c0_i32_9 : i32
    %19 = arith.extui %18 : i1 to i32
    %c0_i32_10 = arith.constant 0 : i32
    %20 = arith.cmpi ne, %19, %c0_i32_10 : i32
    scf.if %20 {
      %c0_14 = arith.constant 0 : index
      %c0_15 = arith.constant 0 : index
      %c0_16 = arith.constant 0 : index
      %23 = vector.load %arg5[%c0_14, %c0_15, %c0_16] : memref<1x2x128xf32, #tpu.memory_space<vmem>>, vector<1x2x128xf32>
      %24 = arith.addf %23, %14 : vector<1x2x128xf32>
      %c0_17 = arith.constant 0 : index
      %c0_18 = arith.constant 0 : index
      %c0_19 = arith.constant 0 : index
      %25 = vector.load %arg5[%c0_17, %c0_18, %c0_19] : memref<1x2x128xf32, #tpu.memory_space<vmem>>, vector<1x2x128xf32>
      tpu.vector_store %arg5[%c0_17, %c0_18, %c0_19], %24 {strides = array<i32>} : memref<1x2x128xf32, #tpu.memory_space<vmem>>, vector<1x2x128xf32>,
    } else {
    }
    %21 = arith.truncf %5 : vector<4x16x128xf32> to vector<4x16x128xbf16>
    %c0_11 = arith.constant 0 : index
    %c0_12 = arith.constant 0 : index
    %c0_13 = arith.constant 0 : index
    %22 = vector.load %arg4[%c0_11, %c0_12, %c0_13] : memref<4x16x128xbf16, #tpu.memory_space<vmem>>, vector<4x16x128xbf16>
    tpu.vector_store %arg4[%c0_11, %c0_12, %c0_13], %21 {strides = array<i32>} : memref<4x16x128xbf16, #tpu.memory_space<vmem>>, vector<4x16x128xbf16>,
    return
  }
  func.func @transform_0(%arg0: i32, %arg1: i32) -> (i32, i32, i32) {
    %c0_i32 = arith.constant 0 : i32
    %c0_i32_0 = arith.constant 0 : i32
    return %arg1, %arg0, %c0_i32 : i32, i32, i32
  }
  func.func @transform_1(%arg0: i32, %arg1: i32) -> (i32, i32) {
    %c0_i32 = arith.constant 0 : i32
    %c0_i32_0 = arith.constant 0 : i32
    %c0_i32_1 = arith.constant 0 : i32
    return %c0_i32, %c0_i32_0 : i32, i32
  }
  func.func @transform_2(%arg0: i32, %arg1: i32) -> (i32, i32, i32) {
    %c0_i32 = arith.constant 0 : i32
    %c0_i32_0 = arith.constant 0 : i32
    return %arg1, %arg0, %c0_i32 : i32, i32, i32
  }
  func.func @transform_3(%arg0: i32, %arg1: i32) -> (i32, i32, i32) {
    %c0_i32 = arith.constant 0 : i32
    %c0_i32_0 = arith.constant 0 : i32
    %c0_i32_1 = arith.constant 0 : i32
    return %arg0, %c0_i32, %c0_i32_0 : i32, i32, i32
  }
}

module attributes {stable_mosaic.version = 11 : i64} {
  func.func @_finalize_kernel(%arg0: i32, %arg1: memref<16x128xf32, #tpu.memory_space<vmem>>, %arg2: memref<16x128xf32, #tpu.memory_space<vmem>>, %arg3: memref<2x128xf32, #tpu.memory_space<vmem>>, %arg4: memref<16x128xf32, #tpu.memory_space<vmem>>) attributes {dimension_semantics = [#tpu.dimension_semantics<parallel>], iteration_bounds = array<i64: 1>, scalar_prefetch = 0 : i64, scratch_operands = 0 : i64, tpu.core_type = #tpu.core_type<tc>, window_params = [{transform_indices = @transform_0, window_bounds = array<i64: 16, 128>}, {transform_indices = @transform_1, window_bounds = array<i64: 16, 128>}, {pipeline_mode = #tpu.pipeline_mode<synchronous>, transform_indices = @transform_2, window_bounds = array<i64: 2, 128>}, {transform_indices = @transform_3, window_bounds = array<i64: 16, 128>}]} {
    %c0 = arith.constant 0 : index
    %c0_0 = arith.constant 0 : index
    %0 = vector.load %arg3[%c0, %c0_0] : memref<2x128xf32, #tpu.memory_space<vmem>>, vector<2x128xf32>
    %1 = vector.extract_strided_slice %0 {offsets = [0, 0], sizes = [1, 128], strides = [1, 1]} : vector<2x128xf32> to vector<1x128xf32>
    %2 = vector.extract_strided_slice %0 {offsets = [1, 0], sizes = [1, 128], strides = [1, 1]} : vector<2x128xf32> to vector<1x128xf32>
    %cst = arith.constant 0.000000e+00 : f32
    %3 = vector.broadcast %cst : f32 to vector<1x128xf32>
    %4 = arith.cmpf oge, %1, %3 : vector<1x128xf32>
    %c0_1 = arith.constant 0 : index
    %c0_2 = arith.constant 0 : index
    %5 = vector.load %arg1[%c0_1, %c0_2] : memref<16x128xf32, #tpu.memory_space<vmem>>, vector<16x128xf32>
    %c0_3 = arith.constant 0 : index
    %c0_4 = arith.constant 0 : index
    %6 = vector.load %arg2[%c0_3, %c0_4] : memref<16x128xf32, #tpu.memory_space<vmem>>, vector<16x128xf32>
    %7 = vector.shape_cast %4 : vector<1x128xi1> to vector<1x128xi1>
    %8 = vector.broadcast %7 : vector<1x128xi1> to vector<16x128xi1>
    %9 = arith.select %8, %5, %6 : vector<16x128xi1>, vector<16x128xf32>
    %10 = vector.broadcast %1 : vector<1x128xf32> to vector<16x128xf32>
    %11 = arith.mulf %9, %10 : vector<16x128xf32>
    %12 = vector.broadcast %2 : vector<1x128xf32> to vector<16x128xf32>
    %13 = arith.addf %11, %12 : vector<16x128xf32>
    %cst_5 = arith.constant 0.000000e+00 : f32
    %14 = vector.broadcast %cst_5 : f32 to vector<16x128xf32>
    %15 = arith.maximumf %13, %14 : vector<16x128xf32>
    %c0_6 = arith.constant 0 : index
    %c0_7 = arith.constant 0 : index
    %16 = vector.load %arg4[%c0_6, %c0_7] : memref<16x128xf32, #tpu.memory_space<vmem>>, vector<16x128xf32>
    tpu.vector_store %arg4[%c0_6, %c0_7], %15 {strides = array<i32>} : memref<16x128xf32, #tpu.memory_space<vmem>>, vector<16x128xf32>,
    return
  }
  func.func @transform_0(%arg0: i32) -> (i32, i32) {
    %c0_i32 = arith.constant 0 : i32
    %c0_i32_0 = arith.constant 0 : i32
    return %arg0, %c0_i32 : i32, i32
  }
  func.func @transform_1(%arg0: i32) -> (i32, i32) {
    %c0_i32 = arith.constant 0 : i32
    %c0_i32_0 = arith.constant 0 : i32
    return %arg0, %c0_i32 : i32, i32
  }
  func.func @transform_2(%arg0: i32) -> (i32, i32) {
    %c0_i32 = arith.constant 0 : i32
    %c0_i32_0 = arith.constant 0 : i32
    %c0_i32_1 = arith.constant 0 : i32
    return %c0_i32, %c0_i32_0 : i32, i32
  }
  func.func @transform_3(%arg0: i32) -> (i32, i32) {
    %c0_i32 = arith.constant 0 : i32
    %c0_i32_0 = arith.constant 0 : i32
    return %arg0, %c0_i32 : i32, i32
  }
}

module attributes {stable_mosaic.version = 11 : i64} {
  func.func @kernel(%arg0: i32, %arg1: i32, %arg2: memref<4x16x128xbf16, #tpu.memory_space<vmem>>, %arg3: memref<2x128xf32, #tpu.memory_space<vmem>>, %arg4: memref<128x128xbf16, #tpu.memory_space<vmem>>, %arg5: memref<1x2x128xf32, #tpu.memory_space<vmem>>, %arg6: memref<16x128xf32, #tpu.memory_space<vmem>>, %arg7: memref<16x128xf32, #tpu.memory_space<vmem>>) attributes {dimension_semantics = [#tpu.dimension_semantics<parallel>, #tpu.dimension_semantics<arbitrary>], iteration_bounds = array<i64: 1, 1>, scalar_prefetch = 0 : i64, scratch_operands = 0 : i64, tpu.core_type = #tpu.core_type<tc>, window_params = [{transform_indices = @transform_0, window_bounds = array<i64: 4, 16, 128>}, {pipeline_mode = #tpu.pipeline_mode<synchronous>, transform_indices = @transform_1, window_bounds = array<i64: 2, 128>}, {pipeline_mode = #tpu.pipeline_mode<synchronous>, transform_indices = @transform_2, window_bounds = array<i64: 128, 128>}, {transform_indices = @transform_3, window_bounds = array<i64: 1, 2, 128>}, {transform_indices = @transform_4, window_bounds = array<i64: 16, 128>}, {transform_indices = @transform_5, window_bounds = array<i64: 16, 128>}]} {
    %c0 = arith.constant 0 : index
    %c0_0 = arith.constant 0 : index
    %c0_1 = arith.constant 0 : index
    %0 = vector.load %arg2[%c0, %c0_0, %c0_1] : memref<4x16x128xbf16, #tpu.memory_space<vmem>>, vector<4x16x128xbf16>
    %1 = vector.shape_cast %0 : vector<4x16x128xbf16> to vector<64x128xbf16>
    %c0_2 = arith.constant 0 : index
    %c0_3 = arith.constant 0 : index
    %2 = vector.load %arg3[%c0_2, %c0_3] : memref<2x128xf32, #tpu.memory_space<vmem>>, vector<2x128xf32>
    %3 = arith.extf %1 : vector<64x128xbf16> to vector<64x128xf32>
    %4 = vector.extract_strided_slice %2 {offsets = [0, 0], sizes = [1, 128], strides = [1, 1]} : vector<2x128xf32> to vector<1x128xf32>
    %5 = vector.broadcast %4 : vector<1x128xf32> to vector<64x128xf32>
    %6 = arith.mulf %3, %5 : vector<64x128xf32>
    %7 = vector.extract_strided_slice %2 {offsets = [1, 0], sizes = [1, 128], strides = [1, 1]} : vector<2x128xf32> to vector<1x128xf32>
    %8 = vector.broadcast %7 : vector<1x128xf32> to vector<64x128xf32>
    %9 = arith.addf %6, %8 : vector<64x128xf32>
    %cst = arith.constant 0.000000e+00 : f32
    %10 = vector.broadcast %cst : f32 to vector<64x128xf32>
    %11 = arith.maximumf %9, %10 : vector<64x128xf32>
    %12 = arith.truncf %11 : vector<64x128xf32> to vector<64x128xbf16>
    %c0_4 = arith.constant 0 : index
    %c0_5 = arith.constant 0 : index
    %13 = vector.load %arg4[%c0_4, %c0_5] : memref<128x128xbf16, #tpu.memory_space<vmem>>, vector<128x128xbf16>
    %cst_6 = arith.constant dense<0.000000e+00> : vector<64x128xf32>
    %14 = tpu.matmul %12, %13, %cst_6 {dimension_numbers = #tpu.dot_dimension_numbers<[1], [0], [0], [1], [0, 0, 1, 1], [], []>} : vector<64x128xbf16>, vector<128x128xbf16>, vector<64x128xf32> -> vector<64x128xf32>
    %15 = vector.shape_cast %14 : vector<64x128xf32> to vector<4x16x128xf32>
    %cst_7 = arith.constant dense<0.000000e+00> : vector<16x128xf32>
    %16 = vector.multi_reduction <add>, %15, %cst_7 [0] : vector<4x16x128xf32> to vector<16x128xf32>
    %cst_8 = arith.constant dense<0.000000e+00> : vector<128xf32>
    %17 = vector.multi_reduction <add>, %16, %cst_8 [0] : vector<16x128xf32> to vector<128xf32>
    %18 = arith.mulf %15, %15 : vector<4x16x128xf32>
    %cst_9 = arith.constant dense<0.000000e+00> : vector<16x128xf32>
    %19 = vector.multi_reduction <add>, %18, %cst_9 [0] : vector<4x16x128xf32> to vector<16x128xf32>
    %cst_10 = arith.constant dense<0.000000e+00> : vector<128xf32>
    %20 = vector.multi_reduction <add>, %19, %cst_10 [0] : vector<16x128xf32> to vector<128xf32>
    %21 = vector.shape_cast %17 : vector<128xf32> to vector<1x128xf32>
    %22 = vector.shape_cast %20 : vector<128xf32> to vector<1x128xf32>
    %23 = tpu.concatenate %21, %22 in 0 : vector<1x128xf32>, vector<1x128xf32> -> vector<2x128xf32>
    %24 = vector.shape_cast %23 : vector<2x128xf32> to vector<1x2x128xf32>
    %c0_i32 = arith.constant 0 : i32
    %25 = arith.cmpi eq, %arg1, %c0_i32 : i32
    %26 = arith.extui %25 : i1 to i32
    %c0_i32_11 = arith.constant 0 : i32
    %27 = arith.cmpi ne, %26, %c0_i32_11 : i32
    scf.if %27 {
      %c0_20 = arith.constant 0 : index
      %c0_21 = arith.constant 0 : index
      %c0_22 = arith.constant 0 : index
      %39 = vector.load %arg5[%c0_20, %c0_21, %c0_22] : memref<1x2x128xf32, #tpu.memory_space<vmem>>, vector<1x2x128xf32>
      tpu.vector_store %arg5[%c0_20, %c0_21, %c0_22], %24 {strides = array<i32>} : memref<1x2x128xf32, #tpu.memory_space<vmem>>, vector<1x2x128xf32>,
    } else {
    }
    %c0_i32_12 = arith.constant 0 : i32
    %28 = arith.cmpi ne, %arg1, %c0_i32_12 : i32
    %29 = arith.extui %28 : i1 to i32
    %c0_i32_13 = arith.constant 0 : i32
    %30 = arith.cmpi ne, %29, %c0_i32_13 : i32
    scf.if %30 {
      %c0_20 = arith.constant 0 : index
      %c0_21 = arith.constant 0 : index
      %c0_22 = arith.constant 0 : index
      %39 = vector.load %arg5[%c0_20, %c0_21, %c0_22] : memref<1x2x128xf32, #tpu.memory_space<vmem>>, vector<1x2x128xf32>
      %40 = arith.addf %39, %24 : vector<1x2x128xf32>
      %c0_23 = arith.constant 0 : index
      %c0_24 = arith.constant 0 : index
      %c0_25 = arith.constant 0 : index
      %41 = vector.load %arg5[%c0_23, %c0_24, %c0_25] : memref<1x2x128xf32, #tpu.memory_space<vmem>>, vector<1x2x128xf32>
      tpu.vector_store %arg5[%c0_23, %c0_24, %c0_25], %40 {strides = array<i32>} : memref<1x2x128xf32, #tpu.memory_space<vmem>>, vector<1x2x128xf32>,
    } else {
    }
    %cst_14 = arith.constant dense<0xFF800000> : vector<16x128xf32>
    %31 = vector.multi_reduction <maximumf>, %15, %cst_14 [0] : vector<4x16x128xf32> to vector<16x128xf32>
    %cst_15 = arith.constant dense<0x7F800000> : vector<16x128xf32>
    %32 = vector.multi_reduction <minimumf>, %15, %cst_15 [0] : vector<4x16x128xf32> to vector<16x128xf32>
    %c0_i32_16 = arith.constant 0 : i32
    %33 = arith.cmpi eq, %arg1, %c0_i32_16 : i32
    %34 = arith.extui %33 : i1 to i32
    %c0_i32_17 = arith.constant 0 : i32
    %35 = arith.cmpi ne, %34, %c0_i32_17 : i32
    scf.if %35 {
      %c0_20 = arith.constant 0 : index
      %c0_21 = arith.constant 0 : index
      %39 = vector.load %arg6[%c0_20, %c0_21] : memref<16x128xf32, #tpu.memory_space<vmem>>, vector<16x128xf32>
      tpu.vector_store %arg6[%c0_20, %c0_21], %31 {strides = array<i32>} : memref<16x128xf32, #tpu.memory_space<vmem>>, vector<16x128xf32>,
      %c0_22 = arith.constant 0 : index
      %c0_23 = arith.constant 0 : index
      %40 = vector.load %arg7[%c0_22, %c0_23] : memref<16x128xf32, #tpu.memory_space<vmem>>, vector<16x128xf32>
      tpu.vector_store %arg7[%c0_22, %c0_23], %32 {strides = array<i32>} : memref<16x128xf32, #tpu.memory_space<vmem>>, vector<16x128xf32>,
    } else {
    }
    %c0_i32_18 = arith.constant 0 : i32
    %36 = arith.cmpi ne, %arg1, %c0_i32_18 : i32
    %37 = arith.extui %36 : i1 to i32
    %c0_i32_19 = arith.constant 0 : i32
    %38 = arith.cmpi ne, %37, %c0_i32_19 : i32
    scf.if %38 {
      %c0_20 = arith.constant 0 : index
      %c0_21 = arith.constant 0 : index
      %39 = vector.load %arg6[%c0_20, %c0_21] : memref<16x128xf32, #tpu.memory_space<vmem>>, vector<16x128xf32>
      %40 = arith.maximumf %39, %31 : vector<16x128xf32>
      %c0_22 = arith.constant 0 : index
      %c0_23 = arith.constant 0 : index
      %41 = vector.load %arg6[%c0_22, %c0_23] : memref<16x128xf32, #tpu.memory_space<vmem>>, vector<16x128xf32>
      tpu.vector_store %arg6[%c0_22, %c0_23], %40 {strides = array<i32>} : memref<16x128xf32, #tpu.memory_space<vmem>>, vector<16x128xf32>,
      %c0_24 = arith.constant 0 : index
      %c0_25 = arith.constant 0 : index
      %42 = vector.load %arg7[%c0_24, %c0_25] : memref<16x128xf32, #tpu.memory_space<vmem>>, vector<16x128xf32>
      %43 = arith.minimumf %42, %32 : vector<16x128xf32>
      %c0_26 = arith.constant 0 : index
      %c0_27 = arith.constant 0 : index
      %44 = vector.load %arg7[%c0_26, %c0_27] : memref<16x128xf32, #tpu.memory_space<vmem>>, vector<16x128xf32>
      tpu.vector_store %arg7[%c0_26, %c0_27], %43 {strides = array<i32>} : memref<16x128xf32, #tpu.memory_space<vmem>>, vector<16x128xf32>,
    } else {
    }
    return
  }
  func.func @transform_0(%arg0: i32, %arg1: i32) -> (i32, i32, i32) {
    %c0_i32 = arith.constant 0 : i32
    %c0_i32_0 = arith.constant 0 : i32
    return %arg1, %arg0, %c0_i32 : i32, i32, i32
  }
  func.func @transform_1(%arg0: i32, %arg1: i32) -> (i32, i32) {
    %c0_i32 = arith.constant 0 : i32
    %c0_i32_0 = arith.constant 0 : i32
    %c0_i32_1 = arith.constant 0 : i32
    return %c0_i32, %c0_i32_0 : i32, i32
  }
  func.func @transform_2(%arg0: i32, %arg1: i32) -> (i32, i32) {
    %c0_i32 = arith.constant 0 : i32
    %c0_i32_0 = arith.constant 0 : i32
    %c0_i32_1 = arith.constant 0 : i32
    return %c0_i32, %c0_i32_0 : i32, i32
  }
  func.func @transform_3(%arg0: i32, %arg1: i32) -> (i32, i32, i32) {
    %c0_i32 = arith.constant 0 : i32
    %c0_i32_0 = arith.constant 0 : i32
    %c0_i32_1 = arith.constant 0 : i32
    return %arg0, %c0_i32, %c0_i32_0 : i32, i32, i32
  }
  func.func @transform_4(%arg0: i32, %arg1: i32) -> (i32, i32) {
    %c0_i32 = arith.constant 0 : i32
    %c0_i32_0 = arith.constant 0 : i32
    return %arg0, %c0_i32 : i32, i32
  }
  func.func @transform_5(%arg0: i32, %arg1: i32) -> (i32, i32) {
    %c0_i32 = arith.constant 0 : i32
    %c0_i32_0 = arith.constant 0 : i32
    return %arg0, %c0_i32 : i32, i32
  }
}

module attributes {stable_mosaic.version = 11 : i64} {
  func.func @kernel(%arg0: i32, %arg1: i32, %arg2: memref<8x16x8xf32, #tpu.memory_space<vmem>>, %arg3: memref<8x128xbf16, #tpu.memory_space<vmem>>, %arg4: memref<8x16x128xbf16, #tpu.memory_space<vmem>>, %arg5: memref<1x2x128xf32, #tpu.memory_space<vmem>>) attributes {dimension_semantics = [#tpu.dimension_semantics<parallel>, #tpu.dimension_semantics<arbitrary>], iteration_bounds = array<i64: 1, 1>, scalar_prefetch = 0 : i64, scratch_operands = 0 : i64, tpu.core_type = #tpu.core_type<tc>, window_params = [{transform_indices = @transform_0, window_bounds = array<i64: 8, 16, 8>}, {pipeline_mode = #tpu.pipeline_mode<synchronous>, transform_indices = @transform_1, window_bounds = array<i64: 8, 128>}, {transform_indices = @transform_2, window_bounds = array<i64: 8, 16, 128>}, {transform_indices = @transform_3, window_bounds = array<i64: 1, 2, 128>}]} {
    %c0 = arith.constant 0 : index
    %c0_0 = arith.constant 0 : index
    %c0_1 = arith.constant 0 : index
    %0 = vector.load %arg2[%c0, %c0_0, %c0_1] : memref<8x16x8xf32, #tpu.memory_space<vmem>>, vector<8x16x8xf32>
    %1 = vector.shape_cast %0 : vector<8x16x8xf32> to vector<128x8xf32>
    %2 = arith.truncf %1 : vector<128x8xf32> to vector<128x8xbf16>
    %c0_2 = arith.constant 0 : index
    %c0_3 = arith.constant 0 : index
    %3 = vector.load %arg3[%c0_2, %c0_3] : memref<8x128xbf16, #tpu.memory_space<vmem>>, vector<8x128xbf16>
    %cst = arith.constant dense<0.000000e+00> : vector<128x128xf32>
    %4 = tpu.matmul %2, %3, %cst {dimension_numbers = #tpu.dot_dimension_numbers<[1], [0], [0], [1], [0, 0, 1, 1], [], []>} : vector<128x8xbf16>, vector<8x128xbf16>, vector<128x128xf32> -> vector<128x128xf32>
    %5 = vector.shape_cast %4 : vector<128x128xf32> to vector<8x16x128xf32>
    %cst_4 = arith.constant dense<0.000000e+00> : vector<16x128xf32>
    %6 = vector.multi_reduction <add>, %5, %cst_4 [0] : vector<8x16x128xf32> to vector<16x128xf32>
    %cst_5 = arith.constant dense<0.000000e+00> : vector<128xf32>
    %7 = vector.multi_reduction <add>, %6, %cst_5 [0] : vector<16x128xf32> to vector<128xf32>
    %8 = arith.mulf %5, %5 : vector<8x16x128xf32>
    %cst_6 = arith.constant dense<0.000000e+00> : vector<16x128xf32>
    %9 = vector.multi_reduction <add>, %8, %cst_6 [0] : vector<8x16x128xf32> to vector<16x128xf32>
    %cst_7 = arith.constant dense<0.000000e+00> : vector<128xf32>
    %10 = vector.multi_reduction <add>, %9, %cst_7 [0] : vector<16x128xf32> to vector<128xf32>
    %11 = vector.shape_cast %7 : vector<128xf32> to vector<1x128xf32>
    %12 = vector.shape_cast %10 : vector<128xf32> to vector<1x128xf32>
    %13 = tpu.concatenate %11, %12 in 0 : vector<1x128xf32>, vector<1x128xf32> -> vector<2x128xf32>
    %14 = vector.shape_cast %13 : vector<2x128xf32> to vector<1x2x128xf32>
    %c0_i32 = arith.constant 0 : i32
    %15 = arith.cmpi eq, %arg1, %c0_i32 : i32
    %16 = arith.extui %15 : i1 to i32
    %c0_i32_8 = arith.constant 0 : i32
    %17 = arith.cmpi ne, %16, %c0_i32_8 : i32
    scf.if %17 {
      %c0_14 = arith.constant 0 : index
      %c0_15 = arith.constant 0 : index
      %c0_16 = arith.constant 0 : index
      %23 = vector.load %arg5[%c0_14, %c0_15, %c0_16] : memref<1x2x128xf32, #tpu.memory_space<vmem>>, vector<1x2x128xf32>
      tpu.vector_store %arg5[%c0_14, %c0_15, %c0_16], %14 {strides = array<i32>} : memref<1x2x128xf32, #tpu.memory_space<vmem>>, vector<1x2x128xf32>,
    } else {
    }
    %c0_i32_9 = arith.constant 0 : i32
    %18 = arith.cmpi ne, %arg1, %c0_i32_9 : i32
    %19 = arith.extui %18 : i1 to i32
    %c0_i32_10 = arith.constant 0 : i32
    %20 = arith.cmpi ne, %19, %c0_i32_10 : i32
    scf.if %20 {
      %c0_14 = arith.constant 0 : index
      %c0_15 = arith.constant 0 : index
      %c0_16 = arith.constant 0 : index
      %23 = vector.load %arg5[%c0_14, %c0_15, %c0_16] : memref<1x2x128xf32, #tpu.memory_space<vmem>>, vector<1x2x128xf32>
      %24 = arith.addf %23, %14 : vector<1x2x128xf32>
      %c0_17 = arith.constant 0 : index
      %c0_18 = arith.constant 0 : index
      %c0_19 = arith.constant 0 : index
      %25 = vector.load %arg5[%c0_17, %c0_18, %c0_19] : memref<1x2x128xf32, #tpu.memory_space<vmem>>, vector<1x2x128xf32>
      tpu.vector_store %arg5[%c0_17, %c0_18, %c0_19], %24 {strides = array<i32>} : memref<1x2x128xf32, #tpu.memory_space<vmem>>, vector<1x2x128xf32>,
    } else {
    }
    %21 = arith.truncf %5 : vector<8x16x128xf32> to vector<8x16x128xbf16>
    %c0_11 = arith.constant 0 : index
    %c0_12 = arith.constant 0 : index
    %c0_13 = arith.constant 0 : index
    %22 = vector.load %arg4[%c0_11, %c0_12, %c0_13] : memref<8x16x128xbf16, #tpu.memory_space<vmem>>, vector<8x16x128xbf16>
    tpu.vector_store %arg4[%c0_11, %c0_12, %c0_13], %21 {strides = array<i32>} : memref<8x16x128xbf16, #tpu.memory_space<vmem>>, vector<8x16x128xbf16>,
    return
  }
  func.func @transform_0(%arg0: i32, %arg1: i32) -> (i32, i32, i32) {
    %c0_i32 = arith.constant 0 : i32
    %c0_i32_0 = arith.constant 0 : i32
    return %arg1, %arg0, %c0_i32 : i32, i32, i32
  }
  func.func @transform_1(%arg0: i32, %arg1: i32) -> (i32, i32) {
    %c0_i32 = arith.constant 0 : i32
    %c0_i32_0 = arith.constant 0 : i32
    %c0_i32_1 = arith.constant 0 : i32
    return %c0_i32, %c0_i32_0 : i32, i32
  }
  func.func @transform_2(%arg0: i32, %arg1: i32) -> (i32, i32, i32) {
    %c0_i32 = arith.constant 0 : i32
    %c0_i32_0 = arith.constant 0 : i32
    return %arg1, %arg0, %c0_i32 : i32, i32, i32
  }
  func.func @transform_3(%arg0: i32, %arg1: i32) -> (i32, i32, i32) {
    %c0_i32 = arith.constant 0 : i32
    %c0_i32_0 = arith.constant 0 : i32
    %c0_i32_1 = arith.constant 0 : i32
    return %arg0, %c0_i32, %c0_i32_0 : i32, i32, i32
  }
}

module attributes {stable_mosaic.version = 11 : i64} {
  func.func @kernel(%arg0: i32, %arg1: i32, %arg2: memref<8x16x128xbf16, #tpu.memory_space<vmem>>, %arg3: memref<2x128xf32, #tpu.memory_space<vmem>>, %arg4: memref<128x128xbf16, #tpu.memory_space<vmem>>, %arg5: memref<1x2x128xf32, #tpu.memory_space<vmem>>, %arg6: memref<16x128xf32, #tpu.memory_space<vmem>>, %arg7: memref<16x128xf32, #tpu.memory_space<vmem>>) attributes {dimension_semantics = [#tpu.dimension_semantics<parallel>, #tpu.dimension_semantics<arbitrary>], iteration_bounds = array<i64: 1, 1>, scalar_prefetch = 0 : i64, scratch_operands = 0 : i64, tpu.core_type = #tpu.core_type<tc>, window_params = [{transform_indices = @transform_0, window_bounds = array<i64: 8, 16, 128>}, {pipeline_mode = #tpu.pipeline_mode<synchronous>, transform_indices = @transform_1, window_bounds = array<i64: 2, 128>}, {pipeline_mode = #tpu.pipeline_mode<synchronous>, transform_indices = @transform_2, window_bounds = array<i64: 128, 128>}, {transform_indices = @transform_3, window_bounds = array<i64: 1, 2, 128>}, {transform_indices = @transform_4, window_bounds = array<i64: 16, 128>}, {transform_indices = @transform_5, window_bounds = array<i64: 16, 128>}]} {
    %c0 = arith.constant 0 : index
    %c0_0 = arith.constant 0 : index
    %c0_1 = arith.constant 0 : index
    %0 = vector.load %arg2[%c0, %c0_0, %c0_1] : memref<8x16x128xbf16, #tpu.memory_space<vmem>>, vector<8x16x128xbf16>
    %1 = vector.shape_cast %0 : vector<8x16x128xbf16> to vector<128x128xbf16>
    %c0_2 = arith.constant 0 : index
    %c0_3 = arith.constant 0 : index
    %2 = vector.load %arg3[%c0_2, %c0_3] : memref<2x128xf32, #tpu.memory_space<vmem>>, vector<2x128xf32>
    %3 = arith.extf %1 : vector<128x128xbf16> to vector<128x128xf32>
    %4 = vector.extract_strided_slice %2 {offsets = [0, 0], sizes = [1, 128], strides = [1, 1]} : vector<2x128xf32> to vector<1x128xf32>
    %5 = vector.broadcast %4 : vector<1x128xf32> to vector<128x128xf32>
    %6 = arith.mulf %3, %5 : vector<128x128xf32>
    %7 = vector.extract_strided_slice %2 {offsets = [1, 0], sizes = [1, 128], strides = [1, 1]} : vector<2x128xf32> to vector<1x128xf32>
    %8 = vector.broadcast %7 : vector<1x128xf32> to vector<128x128xf32>
    %9 = arith.addf %6, %8 : vector<128x128xf32>
    %cst = arith.constant 0.000000e+00 : f32
    %10 = vector.broadcast %cst : f32 to vector<128x128xf32>
    %11 = arith.maximumf %9, %10 : vector<128x128xf32>
    %12 = arith.truncf %11 : vector<128x128xf32> to vector<128x128xbf16>
    %c0_4 = arith.constant 0 : index
    %c0_5 = arith.constant 0 : index
    %13 = vector.load %arg4[%c0_4, %c0_5] : memref<128x128xbf16, #tpu.memory_space<vmem>>, vector<128x128xbf16>
    %cst_6 = arith.constant dense<0.000000e+00> : vector<128x128xf32>
    %14 = tpu.matmul %12, %13, %cst_6 {dimension_numbers = #tpu.dot_dimension_numbers<[1], [0], [0], [1], [0, 0, 1, 1], [], []>} : vector<128x128xbf16>, vector<128x128xbf16>, vector<128x128xf32> -> vector<128x128xf32>
    %15 = vector.shape_cast %14 : vector<128x128xf32> to vector<8x16x128xf32>
    %cst_7 = arith.constant dense<0.000000e+00> : vector<16x128xf32>
    %16 = vector.multi_reduction <add>, %15, %cst_7 [0] : vector<8x16x128xf32> to vector<16x128xf32>
    %cst_8 = arith.constant dense<0.000000e+00> : vector<128xf32>
    %17 = vector.multi_reduction <add>, %16, %cst_8 [0] : vector<16x128xf32> to vector<128xf32>
    %18 = arith.mulf %15, %15 : vector<8x16x128xf32>
    %cst_9 = arith.constant dense<0.000000e+00> : vector<16x128xf32>
    %19 = vector.multi_reduction <add>, %18, %cst_9 [0] : vector<8x16x128xf32> to vector<16x128xf32>
    %cst_10 = arith.constant dense<0.000000e+00> : vector<128xf32>
    %20 = vector.multi_reduction <add>, %19, %cst_10 [0] : vector<16x128xf32> to vector<128xf32>
    %21 = vector.shape_cast %17 : vector<128xf32> to vector<1x128xf32>
    %22 = vector.shape_cast %20 : vector<128xf32> to vector<1x128xf32>
    %23 = tpu.concatenate %21, %22 in 0 : vector<1x128xf32>, vector<1x128xf32> -> vector<2x128xf32>
    %24 = vector.shape_cast %23 : vector<2x128xf32> to vector<1x2x128xf32>
    %c0_i32 = arith.constant 0 : i32
    %25 = arith.cmpi eq, %arg1, %c0_i32 : i32
    %26 = arith.extui %25 : i1 to i32
    %c0_i32_11 = arith.constant 0 : i32
    %27 = arith.cmpi ne, %26, %c0_i32_11 : i32
    scf.if %27 {
      %c0_20 = arith.constant 0 : index
      %c0_21 = arith.constant 0 : index
      %c0_22 = arith.constant 0 : index
      %39 = vector.load %arg5[%c0_20, %c0_21, %c0_22] : memref<1x2x128xf32, #tpu.memory_space<vmem>>, vector<1x2x128xf32>
      tpu.vector_store %arg5[%c0_20, %c0_21, %c0_22], %24 {strides = array<i32>} : memref<1x2x128xf32, #tpu.memory_space<vmem>>, vector<1x2x128xf32>,
    } else {
    }
    %c0_i32_12 = arith.constant 0 : i32
    %28 = arith.cmpi ne, %arg1, %c0_i32_12 : i32
    %29 = arith.extui %28 : i1 to i32
    %c0_i32_13 = arith.constant 0 : i32
    %30 = arith.cmpi ne, %29, %c0_i32_13 : i32
    scf.if %30 {
      %c0_20 = arith.constant 0 : index
      %c0_21 = arith.constant 0 : index
      %c0_22 = arith.constant 0 : index
      %39 = vector.load %arg5[%c0_20, %c0_21, %c0_22] : memref<1x2x128xf32, #tpu.memory_space<vmem>>, vector<1x2x128xf32>
      %40 = arith.addf %39, %24 : vector<1x2x128xf32>
      %c0_23 = arith.constant 0 : index
      %c0_24 = arith.constant 0 : index
      %c0_25 = arith.constant 0 : index
      %41 = vector.load %arg5[%c0_23, %c0_24, %c0_25] : memref<1x2x128xf32, #tpu.memory_space<vmem>>, vector<1x2x128xf32>
      tpu.vector_store %arg5[%c0_23, %c0_24, %c0_25], %40 {strides = array<i32>} : memref<1x2x128xf32, #tpu.memory_space<vmem>>, vector<1x2x128xf32>,
    } else {
    }
    %cst_14 = arith.constant dense<0xFF800000> : vector<16x128xf32>
    %31 = vector.multi_reduction <maximumf>, %15, %cst_14 [0] : vector<8x16x128xf32> to vector<16x128xf32>
    %cst_15 = arith.constant dense<0x7F800000> : vector<16x128xf32>
    %32 = vector.multi_reduction <minimumf>, %15, %cst_15 [0] : vector<8x16x128xf32> to vector<16x128xf32>
    %c0_i32_16 = arith.constant 0 : i32
    %33 = arith.cmpi eq, %arg1, %c0_i32_16 : i32
    %34 = arith.extui %33 : i1 to i32
    %c0_i32_17 = arith.constant 0 : i32
    %35 = arith.cmpi ne, %34, %c0_i32_17 : i32
    scf.if %35 {
      %c0_20 = arith.constant 0 : index
      %c0_21 = arith.constant 0 : index
      %39 = vector.load %arg6[%c0_20, %c0_21] : memref<16x128xf32, #tpu.memory_space<vmem>>, vector<16x128xf32>
      tpu.vector_store %arg6[%c0_20, %c0_21], %31 {strides = array<i32>} : memref<16x128xf32, #tpu.memory_space<vmem>>, vector<16x128xf32>,
      %c0_22 = arith.constant 0 : index
      %c0_23 = arith.constant 0 : index
      %40 = vector.load %arg7[%c0_22, %c0_23] : memref<16x128xf32, #tpu.memory_space<vmem>>, vector<16x128xf32>
      tpu.vector_store %arg7[%c0_22, %c0_23], %32 {strides = array<i32>} : memref<16x128xf32, #tpu.memory_space<vmem>>, vector<16x128xf32>,
    } else {
    }
    %c0_i32_18 = arith.constant 0 : i32
    %36 = arith.cmpi ne, %arg1, %c0_i32_18 : i32
    %37 = arith.extui %36 : i1 to i32
    %c0_i32_19 = arith.constant 0 : i32
    %38 = arith.cmpi ne, %37, %c0_i32_19 : i32
    scf.if %38 {
      %c0_20 = arith.constant 0 : index
      %c0_21 = arith.constant 0 : index
      %39 = vector.load %arg6[%c0_20, %c0_21] : memref<16x128xf32, #tpu.memory_space<vmem>>, vector<16x128xf32>
      %40 = arith.maximumf %39, %31 : vector<16x128xf32>
      %c0_22 = arith.constant 0 : index
      %c0_23 = arith.constant 0 : index
      %41 = vector.load %arg6[%c0_22, %c0_23] : memref<16x128xf32, #tpu.memory_space<vmem>>, vector<16x128xf32>
      tpu.vector_store %arg6[%c0_22, %c0_23], %40 {strides = array<i32>} : memref<16x128xf32, #tpu.memory_space<vmem>>, vector<16x128xf32>,
      %c0_24 = arith.constant 0 : index
      %c0_25 = arith.constant 0 : index
      %42 = vector.load %arg7[%c0_24, %c0_25] : memref<16x128xf32, #tpu.memory_space<vmem>>, vector<16x128xf32>
      %43 = arith.minimumf %42, %32 : vector<16x128xf32>
      %c0_26 = arith.constant 0 : index
      %c0_27 = arith.constant 0 : index
      %44 = vector.load %arg7[%c0_26, %c0_27] : memref<16x128xf32, #tpu.memory_space<vmem>>, vector<16x128xf32>
      tpu.vector_store %arg7[%c0_26, %c0_27], %43 {strides = array<i32>} : memref<16x128xf32, #tpu.memory_space<vmem>>, vector<16x128xf32>,
    } else {
    }
    return
  }
  func.func @transform_0(%arg0: i32, %arg1: i32) -> (i32, i32, i32) {
    %c0_i32 = arith.constant 0 : i32
    %c0_i32_0 = arith.constant 0 : i32
    return %arg1, %arg0, %c0_i32 : i32, i32, i32
  }
  func.func @transform_1(%arg0: i32, %arg1: i32) -> (i32, i32) {
    %c0_i32 = arith.constant 0 : i32
    %c0_i32_0 = arith.constant 0 : i32
    %c0_i32_1 = arith.constant 0 : i32
    return %c0_i32, %c0_i32_0 : i32, i32
  }
  func.func @transform_2(%arg0: i32, %arg1: i32) -> (i32, i32) {
    %c0_i32 = arith.constant 0 : i32
    %c0_i32_0 = arith.constant 0 : i32
    %c0_i32_1 = arith.constant 0 : i32
    return %c0_i32, %c0_i32_0 : i32, i32
  }
  func.func @transform_3(%arg0: i32, %arg1: i32) -> (i32, i32, i32) {
    %c0_i32 = arith.constant 0 : i32
    %c0_i32_0 = arith.constant 0 : i32
    %c0_i32_1 = arith.constant 0 : i32
    return %arg0, %c0_i32, %c0_i32_0 : i32, i32, i32
  }
  func.func @transform_4(%arg0: i32, %arg1: i32) -> (i32, i32) {
    %c0_i32 = arith.constant 0 : i32
    %c0_i32_0 = arith.constant 0 : i32
    return %arg0, %c0_i32 : i32, i32
  }
  func.func @transform_5(%arg0: i32, %arg1: i32) -> (i32, i32) {
    %c0_i32 = arith.constant 0 : i32
    %c0_i32_0 = arith.constant 0 : i32
    return %arg0, %c0_i32 : i32, i32
  }
}

</mosaic_0001>

<llo_original>
// kernel: custom-call.12
$region0: #{custom-call.12}
  %s0 = inlined_call_operand.vmem [shape: f32[2,32], index: 0, kind: output, shape index: {}]

// kernel: pointnet_sa_msg_forward.6
$region0: #{pointnet_sa_msg_forward.6}
  #allocation0 [shape = 'u32[]', space=smem, size = 0x4, offset = 0x4, fixed_abs, tag = 'smem constant byte address 0x4 - core index']
  #allocation1 [shape = 'u32[144,128]{1,0:T(1,128)}', space=vmem, size = 0x12000, scoped, tag = 'internal scratch']
  %s0 = inlined_call_operand.vmem [shape: f32[4,16,8], index: 0, kind: input, shape index: {}]
  %s1 = inlined_call_operand.vmem [shape: bf16[8,128], index: 1, kind: input, shape index: {}]
  %s2 = inlined_call_operand.vmem [shape: bf16[4,16,128], index: 2, kind: output, shape index: {0}]
  %s3 = inlined_call_operand.vmem [shape: f32[1,2,128], index: 3, kind: output, shape index: {1}]
  %4 = xla_tuple %s2, %s3
  %s5 = sld [smem:[#allocation0]]
  $region34: #{pointnet_sa_msg_forward.6} parent=0
    _
  %s7 = ssub.s32 1, %s5
  %s8 = scalar_select 0, %s7, %s5
  // Predicated region
  $region2: #{pointnet_sa_msg_forward.6} parent=0 // pred_check
    _
  $region3: #{pointnet_sa_msg_forward.6} parent=0 // pred_check_branch
    %10 = sbr.rel (0) target = $region5
  $region4: #{pointnet_sa_msg_forward.6} parent=0 // pred_region
    _
  $region5: #{pointnet_sa_msg_forward.6} parent=0 // pred_fallthru
    _
  // Predicated region
  $region6: #{pointnet_sa_msg_forward.6} parent=0 // pred_check
    _
  $region7: #{pointnet_sa_msg_forward.6} parent=0 // pred_check_branch
    %12 = sbr.rel (0) target = $region9
  $region8: #{pointnet_sa_msg_forward.6} parent=0 // pred_region
    _
  $region9: #{pointnet_sa_msg_forward.6} parent=0 // pred_fallthru
    _
  %v14 = vld [vmem:[%s0] sm:$0xff]
  %v15 = vld [vmem:[%s0 + $0x8] sm:$0xff]
  %v16 = vld [vmem:[%s0 + $0x10] sm:$0xff]
  %v17 = vld [vmem:[%s0 + $0x18] sm:$0xff]
  %v18 = vld [vmem:[%s0 + $0x20] sm:$0xff]
  %v19 = vld [vmem:[%s0 + $0x28] sm:$0xff]
  %v20 = vld [vmem:[%s0 + $0x30] sm:$0xff]
  %v21 = vld [vmem:[%s0 + $0x38] sm:$0xff]
  %v22 = vpack.c.bf16 %v15, %v14
  %v23 = vpack.c.bf16 %v17, %v16
  %v24 = vpack.c.bf16 %v19, %v18
  %v25 = vpack.c.bf16 %v21, %v20
  %v26 = vld [vmem:[%s1] sm:$0xf]
  %vm27 = vcmask 64512
  %v29 = vsel %vm27, %v22, 0
  %v32 = vsel %vm27, %v23, 0
  %v35 = vsel %vm27, %v24, 0
  %v38 = vsel %vm27, %v25, 0
  %vm40 = vcmask 1043456
  %v42 = vsel %vm40, %v26, 0
  %44 = vmatprep.subr.bf16.mxu0 0
  %45 = vmatpush1.bf16.msra.mxu0 %v42
  %46 = vmatprep.subr.bf16.mxu0 0
  %47 = vmatpush1.bf16.msra.mxu0 0
  %48 = vmatprep.subr.bf16.mxu0 0
  %49 = vmatpush1.bf16.msra.mxu0 0
  %50 = vmatprep.subr.bf16.mxu0 0
  %51 = vmatpush1.bf16.msra.mxu0 0
  %52 = vmatprep.subr.bf16.mxu0 0
  %53 = vmatpush1.bf16.msra.mxu0 0
  %54 = vmatprep.subr.bf16.mxu0 0
  %55 = vmatpush1.bf16.msra.mxu0 0
  %56 = vmatprep.subr.bf16.mxu0 0
  %57 = vmatpush1.bf16.msra.mxu0 0
  %58 = vmatprep.subr.bf16.mxu0 0
  %59 = vmatpush1.bf16.msra.mxu0 0
  %60 = vmatprep.subr.bf16.mxu0 0
  %61 = vmatpush1.bf16.msra.mxu0 0
  %62 = vmatprep.subr.bf16.mxu0 0
  %63 = vmatpush1.bf16.msra.mxu0 0
  %64 = vmatprep.subr.bf16.mxu0 0
  %65 = vmatpush1.bf16.msra.mxu0 0
  %66 = vmatprep.subr.bf16.mxu0 0
  %67 = vmatpush1.bf16.msra.mxu0 0
  %68 = vmatprep.subr.bf16.mxu0 0
  %69 = vmatpush1.bf16.msra.mxu0 0
  %70 = vmatprep.subr.bf16.mxu0 0
  %71 = vmatpush1.bf16.msra.mxu0 0
  %72 = vmatprep.subr.bf16.mxu0 0
  %73 = vmatpush1.bf16.msra.mxu0 0
  %74 = vmatprep.subr.bf16.mxu0 0
  %75 = vmatpush1.bf16.msra.mxu0 0
  %76 = vmatprep.mubr.bf16.mxu0 0
  %77 = vmatmul.mubr.bf16.gmra.mrb[0].mxu0 %v29
  %v78 = vpop.f32.mrb[0].mxu0
  %v79 = vadd.f32 0.0, %v78
  %v80 = vpop.f32.mrb[0].mxu0
  %v81 = vpop.f32.mrb[0].mxu0
  %v82 = vadd.f32 0.0, %v81
  %v83 = vpop.f32.mrb[0].mxu0
  %84 = vmatprep.mubr.bf16.mxu0 0
  %85 = vmatmul.mubr.bf16.gmra.mrb[0].mxu0 %v32
  %v86 = vpop.f32.mrb[0].mxu0
  %v87 = vadd.f32 0.0, %v86
  %v88 = vpop.f32.mrb[0].mxu0
  %v89 = vpop.f32.mrb[0].mxu0
  %v90 = vadd.f32 0.0, %v89
  %v91 = vpop.f32.mrb[0].mxu0
  %92 = vmatprep.mubr.bf16.mxu0 0
  %93 = vmatmul.mubr.bf16.gmra.mrb[0].mxu0 %v35
  %v94 = vpop.f32.mrb[0].mxu0
  %v95 = vadd.f32 0.0, %v94
  %v96 = vpop.f32.mrb[0].mxu0
  %v97 = vpop.f32.mrb[0].mxu0
  %v98 = vadd.f32 0.0, %v97
  %v99 = vpop.f32.mrb[0].mxu0
  %100 = vmatprep.mubr.bf16.mxu0 0
  %101 = vmatmul.mubr.bf16.gmra.mrb[0].mxu0 %v38
  %v102 = vpop.f32.mrb[0].mxu0
  %v103 = vadd.f32 0.0, %v102
  %v104 = vpop.f32.mrb[0].mxu0
  %v105 = vpop.f32.mrb[0].mxu0
  %v106 = vadd.f32 0.0, %v105
  %v107 = vpop.f32.mrb[0].mxu0
  %108 = vdwg.mxu0
  %v109 = vadd.f32 %v79, %v87
  %v110 = vadd.f32 %v109, %v95
  %v111 = vadd.f32 %v110, %v103
  %v112 = vadd.f32 %v82, %v90
  %v113 = vadd.f32 %v112, %v98
  %v114 = vadd.f32 %v113, %v106
  %v115 = vadd.f32 %v111, %v114
  %v116 = vrot.slane %v115, 4
  %v117 = vadd.f32 %v115, %v116
  %v118 = vrot.slane %v117, 2
  %v119 = vadd.f32 %v117, %v118
  %v120 = vrot.slane %v119, 1
  %v121 = vadd.f32 %v119, %v120
  %v122 = vmul.f32 %v79, %v79
  %v123 = vmul.f32 %v82, %v82
  %v124 = vmul.f32 %v87, %v87
  %v125 = vmul.f32 %v90, %v90
  %v126 = vmul.f32 %v95, %v95
  %v127 = vmul.f32 %v98, %v98
  %v128 = vmul.f32 %v103, %v103
  %v129 = vmul.f32 %v106, %v106
  %v130 = vadd.f32 %v122, %v124
  %v131 = vadd.f32 %v130, %v126
  %v132 = vadd.f32 %v131, %v128
  %v133 = vadd.f32 %v123, %v125
  %v134 = vadd.f32 %v133, %v127
  %v135 = vadd.f32 %v134, %v129
  %v136 = vadd.f32 %v132, %v135
  %v137 = vrot.slane %v136, 4
  %v138 = vadd.f32 %v136, %v137
  %v139 = vrot.slane %v138, 2
  %v140 = vadd.f32 %v138, %v139
  %v141 = vrot.slane %v140, 1
  %v142 = vadd.f32 %v140, %v141
  %vm143 = vcmask 1040384
  %v144 = vsel %vm143, %v121, %v142
  %p145 = scmp.eq.s32.totalorder 0, 0
  // Predicated region
  $region10: #{pointnet_sa_msg_forward.6} parent=0 // pred_check
    %p146 = pneg %p145
  $region11: #{pointnet_sa_msg_forward.6} parent=0 // pred_check_branch
    %148 = sbr.rel (%p146) target = $region13
  $region12: #{pointnet_sa_msg_forward.6} parent=0 // pred_region
    %149 = vst [vmem:[%s3] sm:$0x3] %v144
  $region13: #{pointnet_sa_msg_forward.6} parent=0 // pred_fallthru
    _
  %p150 = scmp.ne.s32.totalorder 0, 0
  // Predicated region
  $region14: #{pointnet_sa_msg_forward.6} parent=0 // pred_check
    %p151 = pneg %p150
  $region15: #{pointnet_sa_msg_forward.6} parent=0 // pred_check_branch
    %153 = sbr.rel (%p151) target = $region17
  $region16: #{pointnet_sa_msg_forward.6} parent=0 // pred_region
    %v154 = vld [vmem:[%s3] sm:$0x3]
    %v155 = vadd.f32 %v154, %v144
    %156 = vst [vmem:[%s3] sm:$0x3] %v155
  $region17: #{pointnet_sa_msg_forward.6} parent=0 // pred_fallthru
    _
  %v157 = vpack.c.bf16 %v82, %v79
  %v158 = vpack.c.bf16 %v90, %v87
  %v159 = vpack.c.bf16 %v98, %v95
  %v160 = vpack.c.bf16 %v106, %v103
  %v165 = vunpack.c.l.b16 %v157
  %v166 = vunpack.c.h.b16 %v157
  %v167 = vunpack.c.l.b16 %v158
  %v168 = vunpack.c.h.b16 %v158
  %v169 = vunpack.c.l.b16 %v159
  %v170 = vunpack.c.h.b16 %v159
  %v171 = vunpack.c.l.b16 %v160
  %v172 = vunpack.c.h.b16 %v160
  %v173 = vpack.c.b16 %v165, %v165
  %v174 = vpack.c.b16 %v166, %v166
  %v175 = vpack.c.b16 %v167, %v167
  %v176 = vpack.c.b16 %v168, %v168
  %v177 = vpack.c.b16 %v169, %v169
  %v178 = vpack.c.b16 %v170, %v170
  %v179 = vpack.c.b16 %v171, %v171
  %v180 = vpack.c.b16 %v172, %v172
  %189 = vst [vmem:[%s2] sm:$0xf] %v173
  %190 = vst [vmem:[%s2 + $0x4] sm:$0xf] %v174
  %191 = vst [vmem:[%s2 + $0x8] sm:$0xf] %v175
  %192 = vst [vmem:[%s2 + $0xc] sm:$0xf] %v176
  %193 = vst [vmem:[%s2 + $0x10] sm:$0xf] %v177
  %194 = vst [vmem:[%s2 + $0x14] sm:$0xf] %v178
  %195 = vst [vmem:[%s2 + $0x18] sm:$0xf] %v179
  %196 = vst [vmem:[%s2 + $0x1c] sm:$0xf] %v180
  // Predicated region
  $region18: #{pointnet_sa_msg_forward.6} parent=0 // pred_check
    _
  $region19: #{pointnet_sa_msg_forward.6} parent=0 // pred_check_branch
    %198 = sbr.rel (0) target = $region21
  $region20: #{pointnet_sa_msg_forward.6} parent=0 // pred_region
    _
  $region21: #{pointnet_sa_msg_forward.6} parent=0 // pred_fallthru
    _
  // Predicated region
  $region22: #{pointnet_sa_msg_forward.6} parent=0 // pred_check
    _
  $region23: #{pointnet_sa_msg_forward.6} parent=0 // pred_check_branch
    %200 = sbr.rel (0) target = $region25
  $region24: #{pointnet_sa_msg_forward.6} parent=0 // pred_region
    _
  $region25: #{pointnet_sa_msg_forward.6} parent=0 // pred_fallthru
    _
  // Predicated region
  $region26: #{pointnet_sa_msg_forward.6} parent=0 // pred_check
    _
  $region27: #{pointnet_sa_msg_forward.6} parent=0 // pred_check_branch
    %202 = sbr.rel (0) target = $region29
  $region28: #{pointnet_sa_msg_forward.6} parent=0 // pred_region
    _
  $region29: #{pointnet_sa_msg_forward.6} parent=0 // pred_fallthru
    _
  // Predicated region
  $region30: #{pointnet_sa_msg_forward.6} parent=0 // pred_check
    _
  $region31: #{pointnet_sa_msg_forward.6} parent=0 // pred_check_branch
    %204 = sbr.rel (0) target = $region33
  $region32: #{pointnet_sa_msg_forward.6} parent=0 // pred_region
    _
  $region33: #{pointnet_sa_msg_forward.6} parent=0 // pred_fallthru
    _

// kernel: pointnet_sa_msg_forward.8
$region0: #{pointnet_sa_msg_forward.8}
  #allocation0 [shape = 'u32[]', space=smem, size = 0x4, offset = 0x4, fixed_abs, tag = 'smem constant byte address 0x4 - core index']
  #allocation1 [shape = 'u32[144,128]{1,0:T(1,128)}', space=vmem, size = 0x12000, scoped, tag = 'internal scratch']
  %s0 = inlined_call_operand.vmem [shape: f32[16,128], index: 0, kind: input, shape index: {}]
  %s1 = inlined_call_operand.vmem [shape: f32[16,128], index: 1, kind: input, shape index: {}]
  %s2 = inlined_call_operand.vmem [shape: f32[2,128], index: 2, kind: input, shape index: {}]
  %s3 = inlined_call_operand.vmem [shape: f32[16,128], index: 3, kind: output, shape index: {}]
  %s4 = sld [smem:[#allocation0]]
  $region22: #{pointnet_sa_msg_forward.8} parent=0
    _
  %s6 = ssub.s32 1, %s4
  %s7 = scalar_select 0, %s6, %s4
  // Predicated region
  $region2: #{pointnet_sa_msg_forward.8} parent=0 // pred_check
    _
  $region3: #{pointnet_sa_msg_forward.8} parent=0 // pred_check_branch
    %9 = sbr.rel (0) target = $region5
  $region4: #{pointnet_sa_msg_forward.8} parent=0 // pred_region
    _
  $region5: #{pointnet_sa_msg_forward.8} parent=0 // pred_fallthru
    _
  // Predicated region
  $region6: #{pointnet_sa_msg_forward.8} parent=0 // pred_check
    _
  $region7: #{pointnet_sa_msg_forward.8} parent=0 // pred_check_branch
    %11 = sbr.rel (0) target = $region9
  $region8: #{pointnet_sa_msg_forward.8} parent=0 // pred_region
    _
  $region9: #{pointnet_sa_msg_forward.8} parent=0 // pred_fallthru
    _
  // Predicated region
  $region10: #{pointnet_sa_msg_forward.8} parent=0 // pred_check
    _
  $region11: #{pointnet_sa_msg_forward.8} parent=0 // pred_check_branch
    %13 = sbr.rel (0) target = $region13
  $region12: #{pointnet_sa_msg_forward.8} parent=0 // pred_region
    _
  $region13: #{pointnet_sa_msg_forward.8} parent=0 // pred_fallthru
    _
  %v14 = vld [vmem:[%s2] sm:$0x3]
  %vm15 = vcmp.ge.f32.partialorder %v14, 0.0
  %v16 = vld [vmem:[%s0] sm:$0xff]
  %v17 = vld [vmem:[%s0 + $0x8] sm:$0xff]
  %v18 = vld [vmem:[%s1] sm:$0xff]
  %v19 = vld [vmem:[%s1 + $0x8] sm:$0xff]
  %v20 = vsel %vm15, 1, 0
  %v21 = vlaneseq
  %v22 = vshrl.u32 %v21, 7
  %v23 = vsub.s32 0, %v22
  %v24 = vrot.slane %v20, %v23
  %vm25 = vcmp.eq.s32.totalorder %v24, 1
  %v26 = vsel %vm25, %v16, %v18
  %v27 = vsel %vm25, %v17, %v19
  %v28 = vlaneseq
  %v29 = vshrl.u32 %v28, 7
  %v30 = vsub.s32 0, %v29
  %v31 = vrot.slane %v14, %v30
  %v32 = vmul.f32 %v26, %v31
  %v33 = vmul.f32 %v27, %v31
  %v34 = vlaneseq
  %v35 = vshrl.u32 %v34, 7
  %v36 = vsub.s32 1, %v35
  %v37 = vrot.slane %v14, %v36
  %v38 = vadd.f32 %v32, %v37
  %v39 = vadd.f32 %v33, %v37
  %v40 = vmax.f32 %v38, 0.0
  %v41 = vmax.f32 %v39, 0.0
  %42 = vst [vmem:[%s3] sm:$0xff] %v40
  %43 = vst [vmem:[%s3 + $0x8] sm:$0xff] %v41
  // Predicated region
  $region14: #{pointnet_sa_msg_forward.8} parent=0 // pred_check
    _
  $region15: #{pointnet_sa_msg_forward.8} parent=0 // pred_check_branch
    %45 = sbr.rel (0) target = $region17
  $region16: #{pointnet_sa_msg_forward.8} parent=0 // pred_region
    _
  $region17: #{pointnet_sa_msg_forward.8} parent=0 // pred_fallthru
    _
  // Predicated region
  $region18: #{pointnet_sa_msg_forward.8} parent=0 // pred_check
    _
  $region19: #{pointnet_sa_msg_forward.8} parent=0 // pred_check_branch
    %47 = sbr.rel (0) target = $region21
  $region20: #{pointnet_sa_msg_forward.8} parent=0 // pred_region
    _
  $region21: #{pointnet_sa_msg_forward.8} parent=0 // pred_fallthru
    _

// kernel: pointnet_sa_msg_forward.7
$region0: #{pointnet_sa_msg_forward.7}
  #allocation0 [shape = 'u32[]', space=smem, size = 0x4, offset = 0x4, fixed_abs, tag = 'smem constant byte address 0x4 - core index']
  #allocation1 [shape = 'u32[144,128]{1,0:T(1,128)}', space=vmem, size = 0x12000, scoped, tag = 'internal scratch']
  %s0 = inlined_call_operand.vmem [shape: bf16[4,16,128], index: 0, kind: input, shape index: {}]
  %s1 = inlined_call_operand.vmem [shape: f32[2,128], index: 1, kind: input, shape index: {}]
  %s2 = inlined_call_operand.vmem [shape: bf16[128,128], index: 2, kind: input, shape index: {}]
  %s3 = inlined_call_operand.vmem [shape: f32[1,2,128], index: 3, kind: output, shape index: {0}]
  %s4 = inlined_call_operand.vmem [shape: f32[16,128], index: 4, kind: output, shape index: {1}]
  %s5 = inlined_call_operand.vmem [shape: f32[16,128], index: 5, kind: output, shape index: {2}]
  %6 = xla_tuple %s3, %s4, %s5
  %s7 = sld [smem:[#allocation0]]
  $region54: #{pointnet_sa_msg_forward.7} parent=0
    _
  %s9 = ssub.s32 1, %s7
  %s10 = scalar_select 0, %s9, %s7
  // Predicated region
  $region2: #{pointnet_sa_msg_forward.7} parent=0 // pred_check
    _
  $region3: #{pointnet_sa_msg_forward.7} parent=0 // pred_check_branch
    %12 = sbr.rel (0) target = $region5
  $region4: #{pointnet_sa_msg_forward.7} parent=0 // pred_region
    _
  $region5: #{pointnet_sa_msg_forward.7} parent=0 // pred_fallthru
    _
  // Predicated region
  $region6: #{pointnet_sa_msg_forward.7} parent=0 // pred_check
    _
  $region7: #{pointnet_sa_msg_forward.7} parent=0 // pred_check_branch
    %14 = sbr.rel (0) target = $region9
  $region8: #{pointnet_sa_msg_forward.7} parent=0 // pred_region
    _
  $region9: #{pointnet_sa_msg_forward.7} parent=0 // pred_fallthru
    _
  // Predicated region
  $region10: #{pointnet_sa_msg_forward.7} parent=0 // pred_check
    _
  $region11: #{pointnet_sa_msg_forward.7} parent=0 // pred_check_branch
    %16 = sbr.rel (0) target = $region13
  $region12: #{pointnet_sa_msg_forward.7} parent=0 // pred_region
    _
  $region13: #{pointnet_sa_msg_forward.7} parent=0 // pred_fallthru
    _
  %v18 = vld [vmem:[%s0] sm:$0xf]
  %v19 = vld [vmem:[%s0 + $0x4] sm:$0xf]
  %v20 = vld [vmem:[%s0 + $0x8] sm:$0xf]
  %v21 = vld [vmem:[%s0 + $0xc] sm:$0xf]
  %v22 = vld [vmem:[%s0 + $0x10] sm:$0xf]
  %v23 = vld [vmem:[%s0 + $0x14] sm:$0xf]
  %v24 = vld [vmem:[%s0 + $0x18] sm:$0xf]
  %v25 = vld [vmem:[%s0 + $0x1c] sm:$0xf]
  %v26 = vld [vmem:[%s1] sm:$0x3]
  %v27 = vunpack.c.l.bf16 %v18
  %v28 = vunpack.c.l.bf16 %v19
  %v29 = vunpack.c.l.bf16 %v20
  %v30 = vunpack.c.l.bf16 %v21
  %v31 = vunpack.c.l.bf16 %v22
  %v32 = vunpack.c.l.bf16 %v23
  %v33 = vunpack.c.l.bf16 %v24
  %v34 = vunpack.c.l.bf16 %v25
  %v35 = vlaneseq
  %v36 = vshrl.u32 %v35, 7
  %v37 = vsub.s32 0, %v36
  %v38 = vrot.slane %v26, %v37
  %v39 = vmul.f32 %v27, %v38
  %v40 = vmul.f32 %v28, %v38
  %v41 = vmul.f32 %v29, %v38
  %v42 = vmul.f32 %v30, %v38
  %v43 = vmul.f32 %v31, %v38
  %v44 = vmul.f32 %v32, %v38
  %v45 = vmul.f32 %v33, %v38
  %v46 = vmul.f32 %v34, %v38
  %v47 = vlaneseq
  %v48 = vshrl.u32 %v47, 7
  %v49 = vsub.s32 1, %v48
  %v50 = vrot.slane %v26, %v49
  %v51 = vadd.f32 %v39, %v50
  %v52 = vadd.f32 %v40, %v50
  %v53 = vadd.f32 %v41, %v50
  %v54 = vadd.f32 %v42, %v50
  %v55 = vadd.f32 %v43, %v50
  %v56 = vadd.f32 %v44, %v50
  %v57 = vadd.f32 %v45, %v50
  %v58 = vadd.f32 %v46, %v50
  %v59 = vmax.f32 %v51, 0.0
  %v60 = vmax.f32 %v52, 0.0
  %v61 = vmax.f32 %v53, 0.0
  %v62 = vmax.f32 %v54, 0.0
  %v63 = vmax.f32 %v55, 0.0
  %v64 = vmax.f32 %v56, 0.0
  %v65 = vmax.f32 %v57, 0.0
  %v66 = vmax.f32 %v58, 0.0
  %v67 = vpack.c.bf16 %v60, %v59
  %v68 = vpack.c.bf16 %v62, %v61
  %v69 = vpack.c.bf16 %v64, %v63
  %v70 = vpack.c.bf16 %v66, %v65
  %v71 = vld [vmem:[%s2] sm:$0xf]
  %v72 = vld [vmem:[%s2 + $0x4] sm:$0xf]
  %v73 = vld [vmem:[%s2 + $0x8] sm:$0xf]
  %v74 = vld [vmem:[%s2 + $0xc] sm:$0xf]
  %v75 = vld [vmem:[%s2 + $0x10] sm:$0xf]
  %v76 = vld [vmem:[%s2 + $0x14] sm:$0xf]
  %v77 = vld [vmem:[%s2 + $0x18] sm:$0xf]
  %v78 = vld [vmem:[%s2 + $0x1c] sm:$0xf]
  %v79 = vld [vmem:[%s2 + $0x20] sm:$0xf]
  %v80 = vld [vmem:[%s2 + $0x24] sm:$0xf]
  %v81 = vld [vmem:[%s2 + $0x28] sm:$0xf]
  %v82 = vld [vmem:[%s2 + $0x2c] sm:$0xf]
  %v83 = vld [vmem:[%s2 + $0x30] sm:$0xf]
  %v84 = vld [vmem:[%s2 + $0x34] sm:$0xf]
  %v85 = vld [vmem:[%s2 + $0x38] sm:$0xf]
  %v86 = vld [vmem:[%s2 + $0x3c] sm:$0xf]
  %v103 = vunpack.c.l.b16 %v71
  %v104 = vunpack.c.l.b16 %v72
  %v105 = vunpack.c.l.b16 %v73
  %v106 = vunpack.c.l.b16 %v74
  %v107 = vunpack.c.l.b16 %v75
  %v108 = vunpack.c.l.b16 %v76
  %v109 = vunpack.c.l.b16 %v77
  %v110 = vunpack.c.l.b16 %v78
  %v111 = vunpack.c.l.b16 %v79
  %v112 = vunpack.c.l.b16 %v80
  %v113 = vunpack.c.l.b16 %v81
  %v114 = vunpack.c.l.b16 %v82
  %v115 = vunpack.c.l.b16 %v83
  %v116 = vunpack.c.l.b16 %v84
  %v117 = vunpack.c.l.b16 %v85
  %v118 = vunpack.c.l.b16 %v86
  %v119 = vpack.c.b16 %v104, %v103
  %v120 = vpack.c.b16 %v106, %v105
  %v121 = vpack.c.b16 %v108, %v107
  %v122 = vpack.c.b16 %v110, %v109
  %v123 = vpack.c.b16 %v112, %v111
  %v124 = vpack.c.b16 %v114, %v113
  %v125 = vpack.c.b16 %v116, %v115
  %v126 = vpack.c.b16 %v118, %v117
  %135 = vmatprep.subr.bf16.mxu0 0
  %136 = vmatpush1.bf16.msra.mxu0 %v119
  %137 = vmatprep.subr.bf16.mxu0 0
  %138 = vmatpush1.bf16.msra.mxu0 %v120
  %139 = vmatprep.subr.bf16.mxu0 0
  %140 = vmatpush1.bf16.msra.mxu0 %v121
  %141 = vmatprep.subr.bf16.mxu0 0
  %142 = vmatpush1.bf16.msra.mxu0 %v122
  %143 = vmatprep.subr.bf16.mxu0 0
  %144 = vmatpush1.bf16.msra.mxu0 %v123
  %145 = vmatprep.subr.bf16.mxu0 0
  %146 = vmatpush1.bf16.msra.mxu0 %v124
  %147 = vmatprep.subr.bf16.mxu0 0
  %148 = vmatpush1.bf16.msra.mxu0 %v125
  %149 = vmatprep.subr.bf16.mxu0 0
  %150 = vmatpush1.bf16.msra.mxu0 %v126
  %151 = vmatprep.subr.bf16.mxu0 0
  %152 = vmatpush1.bf16.msra.mxu0 0
  %153 = vmatprep.subr.bf16.mxu0 0
  %154 = vmatpush1.bf16.msra.mxu0 0
  %155 = vmatprep.subr.bf16.mxu0 0
  %156 = vmatpush1.bf16.msra.mxu0 0
  %157 = vmatprep.subr.bf16.mxu0 0
  %158 = vmatpush1.bf16.msra.mxu0 0
  %159 = vmatprep.subr.bf16.mxu0 0
  %160 = vmatpush1.bf16.msra.mxu0 0
  %161 = vmatprep.subr.bf16.mxu0 0
  %162 = vmatpush1.bf16.msra.mxu0 0
  %163 = vmatprep.subr.bf16.mxu0 0
  %164 = vmatpush1.bf16.msra.mxu0 0
  %165 = vmatprep.subr.bf16.mxu0 0
  %166 = vmatpush1.bf16.msra.mxu0 0
  %167 = vmatprep.mubr.bf16.mxu0 0
  %168 = vmatmul.mubr.bf16.gmra.mrb[0].mxu0 %v67
  %v169 = vpop.f32.mrb[0].mxu0
  %v170 = vadd.f32 0.0, %v169
  %v171 = vpop.f32.mrb[0].mxu0
  %v172 = vpop.f32.mrb[0].mxu0
  %v173 = vadd.f32 0.0, %v172
  %v174 = vpop.f32.mrb[0].mxu0
  %175 = vmatprep.mubr.bf16.mxu0 0
  %176 = vmatmul.mubr.bf16.gmra.mrb[0].mxu0 %v68
  %v177 = vpop.f32.mrb[0].mxu0
  %v178 = vadd.f32 0.0, %v177
  %v179 = vpop.f32.mrb[0].mxu0
  %v180 = vpop.f32.mrb[0].mxu0
  %v181 = vadd.f32 0.0, %v180
  %v182 = vpop.f32.mrb[0].mxu0
  %183 = vmatprep.mubr.bf16.mxu0 0
  %184 = vmatmul.mubr.bf16.gmra.mrb[0].mxu0 %v69
  %v185 = vpop.f32.mrb[0].mxu0
  %v186 = vadd.f32 0.0, %v185
  %v187 = vpop.f32.mrb[0].mxu0
  %v188 = vpop.f32.mrb[0].mxu0
  %v189 = vadd.f32 0.0, %v188
  %v190 = vpop.f32.mrb[0].mxu0
  %191 = vmatprep.mubr.bf16.mxu0 0
  %192 = vmatmul.mubr.bf16.gmra.mrb[0].mxu0 %v70
  %v193 = vpop.f32.mrb[0].mxu0
  %v194 = vadd.f32 0.0, %v193
  %v195 = vpop.f32.mrb[0].mxu0
  %v196 = vpop.f32.mrb[0].mxu0
  %v197 = vadd.f32 0.0, %v196
  %v198 = vpop.f32.mrb[0].mxu0
  %199 = vdwg.mxu0
  %v200 = vadd.f32 %v170, %v178
  %v201 = vadd.f32 %v200, %v186
  %v202 = vadd.f32 %v201, %v194
  %v203 = vadd.f32 %v173, %v181
  %v204 = vadd.f32 %v203, %v189
  %v205 = vadd.f32 %v204, %v197
  %v206 = vadd.f32 %v202, %v205
  %v207 = vrot.slane %v206, 4
  %v208 = vadd.f32 %v206, %v207
  %v209 = vrot.slane %v208, 2
  %v210 = vadd.f32 %v208, %v209
  %v211 = vrot.slane %v210, 1
  %v212 = vadd.f32 %v210, %v211
  %v213 = vmul.f32 %v170, %v170
  %v214 = vmul.f32 %v173, %v173
  %v215 = vmul.f32 %v178, %v178
  %v216 = vmul.f32 %v181, %v181
  %v217 = vmul.f32 %v186, %v186
  %v218 = vmul.f32 %v189, %v189
  %v219 = vmul.f32 %v194, %v194
  %v220 = vmul.f32 %v197, %v197
  %v221 = vadd.f32 %v213, %v215
  %v222 = vadd.f32 %v221, %v217
  %v223 = vadd.f32 %v222, %v219
  %v224 = vadd.f32 %v214, %v216
  %v225 = vadd.f32 %v224, %v218
  %v226 = vadd.f32 %v225, %v220
  %v227 = vadd.f32 %v223, %v226
  %v228 = vrot.slane %v227, 4
  %v229 = vadd.f32 %v227, %v228
  %v230 = vrot.slane %v229, 2
  %v231 = vadd.f32 %v229, %v230
  %v232 = vrot.slane %v231, 1
  %v233 = vadd.f32 %v231, %v232
  %vm234 = vcmask 1040384
  %v235 = vsel %vm234, %v212, %v233
  %p236 = scmp.eq.s32.totalorder 0, 0
  // Predicated region
  $region14: #{pointnet_sa_msg_forward.7} parent=0 // pred_check
    %p237 = pneg %p236
  $region15: #{pointnet_sa_msg_forward.7} parent=0 // pred_check_branch
    %239 = sbr.rel (%p237) target = $region17
  $region16: #{pointnet_sa_msg_forward.7} parent=0 // pred_region
    %240 = vst [vmem:[%s3] sm:$0x3] %v235
  $region17: #{pointnet_sa_msg_forward.7} parent=0 // pred_fallthru
    _
  %p241 = scmp.ne.s32.totalorder 0, 0
  // Predicated region
  $region18: #{pointnet_sa_msg_forward.7} parent=0 // pred_check
    %p242 = pneg %p241
  $region19: #{pointnet_sa_msg_forward.7} parent=0 // pred_check_branch
    %244 = sbr.rel (%p242) target = $region21
  $region20: #{pointnet_sa_msg_forward.7} parent=0 // pred_region
    %v245 = vld [vmem:[%s3] sm:$0x3]
    %v246 = vadd.f32 %v245, %v235
    %247 = vst [vmem:[%s3] sm:$0x3] %v246
  $region21: #{pointnet_sa_msg_forward.7} parent=0 // pred_fallthru
    _
  %v248 = vmax.f32 %v170, %v186
  %v249 = vmax.f32 %v178, %v194
  %v250 = vmax.f32 %v248, %v249
  %v251 = vmax.f32 %v173, %v189
  %v252 = vmax.f32 %v181, %v197
  %v253 = vmax.f32 %v251, %v252
  %v254 = vmin.f32 %v170, %v186
  %v255 = vmin.f32 %v178, %v194
  %v256 = vmin.f32 %v254, %v255
  %v257 = vmin.f32 %v173, %v189
  %v258 = vmin.f32 %v181, %v197
  %v259 = vmin.f32 %v257, %v258
  // Predicated region
  $region22: #{pointnet_sa_msg_forward.7} parent=0 // pred_check
    %p260 = pneg %p236
  $region23: #{pointnet_sa_msg_forward.7} parent=0 // pred_check_branch
    %262 = sbr.rel (%p260) target = $region25
  $region24: #{pointnet_sa_msg_forward.7} parent=0 // pred_region
    %263 = vst [vmem:[%s4] sm:$0xff] %v250
    %264 = vst [vmem:[%s4 + $0x8] sm:$0xff] %v253
    %265 = vst [vmem:[%s5] sm:$0xff] %v256
    %266 = vst [vmem:[%s5 + $0x8] sm:$0xff] %v259
  $region25: #{pointnet_sa_msg_forward.7} parent=0 // pred_fallthru
    _
  // Predicated region
  $region26: #{pointnet_sa_msg_forward.7} parent=0 // pred_check
    %p267 = pneg %p241
  $region27: #{pointnet_sa_msg_forward.7} parent=0 // pred_check_branch
    %269 = sbr.rel (%p267) target = $region29
  $region28: #{pointnet_sa_msg_forward.7} parent=0 // pred_region
    %v270 = vld [vmem:[%s4] sm:$0xff]
    %v271 = vld [vmem:[%s4 + $0x8] sm:$0xff]
    %v272 = vmax.f32 %v270, %v250
    %v273 = vmax.f32 %v271, %v253
    %274 = vst [vmem:[%s4] sm:$0xff] %v272
    %275 = vst [vmem:[%s4 + $0x8] sm:$0xff] %v273
    %v276 = vld [vmem:[%s5] sm:$0xff]
    %v277 = vld [vmem:[%s5 + $0x8] sm:$0xff]
    %v278 = vmin.f32 %v276, %v256
    %v279 = vmin.f32 %v277, %v259
    %280 = vst [vmem:[%s5] sm:$0xff] %v278
    %281 = vst [vmem:[%s5 + $0x8] sm:$0xff] %v279
  $region29: #{pointnet_sa_msg_forward.7} parent=0 // pred_fallthru
    _
  // Predicated region
  $region30: #{pointnet_sa_msg_forward.7} parent=0 // pred_check
    _
  $region31: #{pointnet_sa_msg_forward.7} parent=0 // pred_check_branch
    %283 = sbr.rel (0) target = $region33
  $region32: #{pointnet_sa_msg_forward.7} parent=0 // pred_region
    _
  $region33: #{pointnet_sa_msg_forward.7} parent=0 // pred_fallthru
    _
  // Predicated region
  $region34: #{pointnet_sa_msg_forward.7} parent=0 // pred_check
    _
  $region35: #{pointnet_sa_msg_forward.7} parent=0 // pred_check_branch
    %285 = sbr.rel (0) target = $region37
  $region36: #{pointnet_sa_msg_forward.7} parent=0 // pred_region
    _
  $region37: #{pointnet_sa_msg_forward.7} parent=0 // pred_fallthru
    _
  // Predicated region
  $region38: #{pointnet_sa_msg_forward.7} parent=0 // pred_check
    _
  $region39: #{pointnet_sa_msg_forward.7} parent=0 // pred_check_branch
    %287 = sbr.rel (0) target = $region41
  $region40: #{pointnet_sa_msg_forward.7} parent=0 // pred_region
    _
  $region41: #{pointnet_sa_msg_forward.7} parent=0 // pred_fallthru
    _
  // Predicated region
  $region42: #{pointnet_sa_msg_forward.7} parent=0 // pred_check
    _
  $region43: #{pointnet_sa_msg_forward.7} parent=0 // pred_check_branch
    %289 = sbr.rel (0) target = $region45
  $region44: #{pointnet_sa_msg_forward.7} parent=0 // pred_region
    _
  $region45: #{pointnet_sa_msg_forward.7} parent=0 // pred_fallthru
    _
  // Predicated region
  $region46: #{pointnet_sa_msg_forward.7} parent=0 // pred_check
    _
  $region47: #{pointnet_sa_msg_forward.7} parent=0 // pred_check_branch
    %291 = sbr.rel (0) target = $region49
  $region48: #{pointnet_sa_msg_forward.7} parent=0 // pred_region
    _
  $region49: #{pointnet_sa_msg_forward.7} parent=0 // pred_fallthru
    _
  // Predicated region
  $region50: #{pointnet_sa_msg_forward.7} parent=0 // pred_check
    _
  $region51: #{pointnet_sa_msg_forward.7} parent=0 // pred_check_branch
    %293 = sbr.rel (0) target = $region53
  $region52: #{pointnet_sa_msg_forward.7} parent=0 // pred_region
    _
  $region53: #{pointnet_sa_msg_forward.7} parent=0 // pred_fallthru
    _

// kernel: pointnet_sa_msg_forward.9
$region0: #{pointnet_sa_msg_forward.9}
  #allocation0 [shape = 'u32[]', space=smem, size = 0x4, offset = 0x4, fixed_abs, tag = 'smem constant byte address 0x4 - core index']
  #allocation1 [shape = 'u32[144,128]{1,0:T(1,128)}', space=vmem, size = 0x12000, scoped, tag = 'internal scratch']
  %s0 = inlined_call_operand.vmem [shape: f32[8,16,8], index: 0, kind: input, shape index: {}]
  %s1 = inlined_call_operand.vmem [shape: bf16[8,128], index: 1, kind: input, shape index: {}]
  %s2 = inlined_call_operand.vmem [shape: bf16[8,16,128], index: 2, kind: output, shape index: {0}]
  %s3 = inlined_call_operand.vmem [shape: f32[1,2,128], index: 3, kind: output, shape index: {1}]
  %4 = xla_tuple %s2, %s3
  %s5 = sld [smem:[#allocation0]]
  $region34: #{pointnet_sa_msg_forward.9} parent=0
    _
  %s7 = ssub.s32 1, %s5
  %s8 = scalar_select 0, %s7, %s5
  // Predicated region
  $region2: #{pointnet_sa_msg_forward.9} parent=0 // pred_check
    _
  $region3: #{pointnet_sa_msg_forward.9} parent=0 // pred_check_branch
    %10 = sbr.rel (0) target = $region5
  $region4: #{pointnet_sa_msg_forward.9} parent=0 // pred_region
    _
  $region5: #{pointnet_sa_msg_forward.9} parent=0 // pred_fallthru
    _
  // Predicated region
  $region6: #{pointnet_sa_msg_forward.9} parent=0 // pred_check
    _
  $region7: #{pointnet_sa_msg_forward.9} parent=0 // pred_check_branch
    %12 = sbr.rel (0) target = $region9
  $region8: #{pointnet_sa_msg_forward.9} parent=0 // pred_region
    _
  $region9: #{pointnet_sa_msg_forward.9} parent=0 // pred_fallthru
    _
  %v14 = vld [vmem:[%s0] sm:$0xff]
  %v15 = vld [vmem:[%s0 + $0x8] sm:$0xff]
  %v16 = vld [vmem:[%s0 + $0x10] sm:$0xff]
  %v17 = vld [vmem:[%s0 + $0x18] sm:$0xff]
  %v18 = vld [vmem:[%s0 + $0x20] sm:$0xff]
  %v19 = vld [vmem:[%s0 + $0x28] sm:$0xff]
  %v20 = vld [vmem:[%s0 + $0x30] sm:$0xff]
  %v21 = vld [vmem:[%s0 + $0x38] sm:$0xff]
  %v22 = vld [vmem:[%s0 + $0x40] sm:$0xff]
  %v23 = vld [vmem:[%s0 + $0x48] sm:$0xff]
  %v24 = vld [vmem:[%s0 + $0x50] sm:$0xff]
  %v25 = vld [vmem:[%s0 + $0x58] sm:$0xff]
  %v26 = vld [vmem:[%s0 + $0x60] sm:$0xff]
  %v27 = vld [vmem:[%s0 + $0x68] sm:$0xff]
  %v28 = vld [vmem:[%s0 + $0x70] sm:$0xff]
  %v29 = vld [vmem:[%s0 + $0x78] sm:$0xff]
  %v30 = vpack.c.bf16 %v15, %v14
  %v31 = vpack.c.bf16 %v17, %v16
  %v32 = vpack.c.bf16 %v19, %v18
  %v33 = vpack.c.bf16 %v21, %v20
  %v34 = vpack.c.bf16 %v23, %v22
  %v35 = vpack.c.bf16 %v25, %v24
  %v36 = vpack.c.bf16 %v27, %v26
  %v37 = vpack.c.bf16 %v29, %v28
  %v38 = vld [vmem:[%s1] sm:$0xf]
  %vm39 = vcmask 64512
  %v41 = vsel %vm39, %v30, 0
  %v44 = vsel %vm39, %v31, 0
  %v47 = vsel %vm39, %v32, 0
  %v50 = vsel %vm39, %v33, 0
  %v53 = vsel %vm39, %v34, 0
  %v56 = vsel %vm39, %v35, 0
  %v59 = vsel %vm39, %v36, 0
  %v62 = vsel %vm39, %v37, 0
  %vm64 = vcmask 1043456
  %v66 = vsel %vm64, %v38, 0
  %68 = vmatprep.subr.bf16.mxu0 0
  %69 = vmatpush1.bf16.msra.mxu0 %v66
  %70 = vmatprep.subr.bf16.mxu0 0
  %71 = vmatpush1.bf16.msra.mxu0 0
  %72 = vmatprep.subr.bf16.mxu0 0
  %73 = vmatpush1.bf16.msra.mxu0 0
  %74 = vmatprep.subr.bf16.mxu0 0
  %75 = vmatpush1.bf16.msra.mxu0 0
  %76 = vmatprep.subr.bf16.mxu0 0
  %77 = vmatpush1.bf16.msra.mxu0 0
  %78 = vmatprep.subr.bf16.mxu0 0
  %79 = vmatpush1.bf16.msra.mxu0 0
  %80 = vmatprep.subr.bf16.mxu0 0
  %81 = vmatpush1.bf16.msra.mxu0 0
  %82 = vmatprep.subr.bf16.mxu0 0
  %83 = vmatpush1.bf16.msra.mxu0 0
  %84 = vmatprep.subr.bf16.mxu0 0
  %85 = vmatpush1.bf16.msra.mxu0 0
  %86 = vmatprep.subr.bf16.mxu0 0
  %87 = vmatpush1.bf16.msra.mxu0 0
  %88 = vmatprep.subr.bf16.mxu0 0
  %89 = vmatpush1.bf16.msra.mxu0 0
  %90 = vmatprep.subr.bf16.mxu0 0
  %91 = vmatpush1.bf16.msra.mxu0 0
  %92 = vmatprep.subr.bf16.mxu0 0
  %93 = vmatpush1.bf16.msra.mxu0 0
  %94 = vmatprep.subr.bf16.mxu0 0
  %95 = vmatpush1.bf16.msra.mxu0 0
  %96 = vmatprep.subr.bf16.mxu0 0
  %97 = vmatpush1.bf16.msra.mxu0 0
  %98 = vmatprep.subr.bf16.mxu0 0
  %99 = vmatpush1.bf16.msra.mxu0 0
  %100 = vmatprep.mubr.bf16.mxu0 0
  %101 = vmatmul.mubr.bf16.gmra.mrb[0].mxu0 %v41
  %v102 = vpop.f32.mrb[0].mxu0
  %v103 = vadd.f32 0.0, %v102
  %v104 = vpop.f32.mrb[0].mxu0
  %v105 = vpop.f32.mrb[0].mxu0
  %v106 = vadd.f32 0.0, %v105
  %v107 = vpop.f32.mrb[0].mxu0
  %108 = vmatprep.mubr.bf16.mxu0 0
  %109 = vmatmul.mubr.bf16.gmra.mrb[0].mxu0 %v44
  %v110 = vpop.f32.mrb[0].mxu0
  %v111 = vadd.f32 0.0, %v110
  %v112 = vpop.f32.mrb[0].mxu0
  %v113 = vpop.f32.mrb[0].mxu0
  %v114 = vadd.f32 0.0, %v113
  %v115 = vpop.f32.mrb[0].mxu0
  %116 = vmatprep.mubr.bf16.mxu0 0
  %117 = vmatmul.mubr.bf16.gmra.mrb[0].mxu0 %v47
  %v118 = vpop.f32.mrb[0].mxu0
  %v119 = vadd.f32 0.0, %v118
  %v120 = vpop.f32.mrb[0].mxu0
  %v121 = vpop.f32.mrb[0].mxu0
  %v122 = vadd.f32 0.0, %v121
  %v123 = vpop.f32.mrb[0].mxu0
  %124 = vmatprep.mubr.bf16.mxu0 0
  %125 = vmatmul.mubr.bf16.gmra.mrb[0].mxu0 %v50
  %v126 = vpop.f32.mrb[0].mxu0
  %v127 = vadd.f32 0.0, %v126
  %v128 = vpop.f32.mrb[0].mxu0
  %v129 = vpop.f32.mrb[0].mxu0
  %v130 = vadd.f32 0.0, %v129
  %v131 = vpop.f32.mrb[0].mxu0
  %132 = vmatprep.mubr.bf16.mxu0 0
  %133 = vmatmul.mubr.bf16.gmra.mrb[0].mxu0 %v53
  %v134 = vpop.f32.mrb[0].mxu0
  %v135 = vadd.f32 0.0, %v134
  %v136 = vpop.f32.mrb[0].mxu0
  %v137 = vpop.f32.mrb[0].mxu0
  %v138 = vadd.f32 0.0, %v137
  %v139 = vpop.f32.mrb[0].mxu0
  %140 = vmatprep.mubr.bf16.mxu0 0
  %141 = vmatmul.mubr.bf16.gmra.mrb[0].mxu0 %v56
  %v142 = vpop.f32.mrb[0].mxu0
  %v143 = vadd.f32 0.0, %v142
  %v144 = vpop.f32.mrb[0].mxu0
  %v145 = vpop.f32.mrb[0].mxu0
  %v146 = vadd.f32 0.0, %v145
  %v147 = vpop.f32.mrb[0].mxu0
  %148 = vmatprep.mubr.bf16.mxu0 0
  %149 = vmatmul.mubr.bf16.gmra.mrb[0].mxu0 %v59
  %v150 = vpop.f32.mrb[0].mxu0
  %v151 = vadd.f32 0.0, %v150
  %v152 = vpop.f32.mrb[0].mxu0
  %v153 = vpop.f32.mrb[0].mxu0
  %v154 = vadd.f32 0.0, %v153
  %v155 = vpop.f32.mrb[0].mxu0
  %156 = vmatprep.mubr.bf16.mxu0 0
  %157 = vmatmul.mubr.bf16.gmra.mrb[0].mxu0 %v62
  %v158 = vpop.f32.mrb[0].mxu0
  %v159 = vadd.f32 0.0, %v158
  %v160 = vpop.f32.mrb[0].mxu0
  %v161 = vpop.f32.mrb[0].mxu0
  %v162 = vadd.f32 0.0, %v161
  %v163 = vpop.f32.mrb[0].mxu0
  %164 = vdwg.mxu0
  %v165 = vadd.f32 %v103, %v111
  %v166 = vadd.f32 %v165, %v119
  %v167 = vadd.f32 %v166, %v127
  %v168 = vadd.f32 %v167, %v135
  %v169 = vadd.f32 %v168, %v143
  %v170 = vadd.f32 %v169, %v151
  %v171 = vadd.f32 %v170, %v159
  %v172 = vadd.f32 %v106, %v114
  %v173 = vadd.f32 %v172, %v122
  %v174 = vadd.f32 %v173, %v130
  %v175 = vadd.f32 %v174, %v138
  %v176 = vadd.f32 %v175, %v146
  %v177 = vadd.f32 %v176, %v154
  %v178 = vadd.f32 %v177, %v162
  %v179 = vadd.f32 %v171, %v178
  %v180 = vrot.slane %v179, 4
  %v181 = vadd.f32 %v179, %v180
  %v182 = vrot.slane %v181, 2
  %v183 = vadd.f32 %v181, %v182
  %v184 = vrot.slane %v183, 1
  %v185 = vadd.f32 %v183, %v184
  %v186 = vmul.f32 %v103, %v103
  %v187 = vmul.f32 %v106, %v106
  %v188 = vmul.f32 %v111, %v111
  %v189 = vmul.f32 %v114, %v114
  %v190 = vmul.f32 %v119, %v119
  %v191 = vmul.f32 %v122, %v122
  %v192 = vmul.f32 %v127, %v127
  %v193 = vmul.f32 %v130, %v130
  %v194 = vmul.f32 %v135, %v135
  %v195 = vmul.f32 %v138, %v138
  %v196 = vmul.f32 %v143, %v143
  %v197 = vmul.f32 %v146, %v146
  %v198 = vmul.f32 %v151, %v151
  %v199 = vmul.f32 %v154, %v154
  %v200 = vmul.f32 %v159, %v159
  %v201 = vmul.f32 %v162, %v162
  %v202 = vadd.f32 %v186, %v188
  %v203 = vadd.f32 %v202, %v190
  %v204 = vadd.f32 %v203, %v192
  %v205 = vadd.f32 %v204, %v194
  %v206 = vadd.f32 %v205, %v196
  %v207 = vadd.f32 %v206, %v198
  %v208 = vadd.f32 %v207, %v200
  %v209 = vadd.f32 %v187, %v189
  %v210 = vadd.f32 %v209, %v191
  %v211 = vadd.f32 %v210, %v193
  %v212 = vadd.f32 %v211, %v195
  %v213 = vadd.f32 %v212, %v197
  %v214 = vadd.f32 %v213, %v199
  %v215 = vadd.f32 %v214, %v201
  %v216 = vadd.f32 %v208, %v215
  %v217 = vrot.slane %v216, 4
  %v218 = vadd.f32 %v216, %v217
  %v219 = vrot.slane %v218, 2
  %v220 = vadd.f32 %v218, %v219
  %v221 = vrot.slane %v220, 1
  %v222 = vadd.f32 %v220, %v221
  %vm223 = vcmask 1040384
  %v224 = vsel %vm223, %v185, %v222
  %p225 = scmp.eq.s32.totalorder 0, 0
  // Predicated region
  $region10: #{pointnet_sa_msg_forward.9} parent=0 // pred_check
    %p226 = pneg %p225
  $region11: #{pointnet_sa_msg_forward.9} parent=0 // pred_check_branch
    %228 = sbr.rel (%p226) target = $region13
  $region12: #{pointnet_sa_msg_forward.9} parent=0 // pred_region
    %229 = vst [vmem:[%s3] sm:$0x3] %v224
  $region13: #{pointnet_sa_msg_forward.9} parent=0 // pred_fallthru
    _
  %p230 = scmp.ne.s32.totalorder 0, 0
  // Predicated region
  $region14: #{pointnet_sa_msg_forward.9} parent=0 // pred_check
    %p231 = pneg %p230
  $region15: #{pointnet_sa_msg_forward.9} parent=0 // pred_check_branch
    %233 = sbr.rel (%p231) target = $region17
  $region16: #{pointnet_sa_msg_forward.9} parent=0 // pred_region
    %v234 = vld [vmem:[%s3] sm:$0x3]
    %v235 = vadd.f32 %v234, %v224
    %236 = vst [vmem:[%s3] sm:$0x3] %v235
  $region17: #{pointnet_sa_msg_forward.9} parent=0 // pred_fallthru
    _
  %v237 = vpack.c.bf16 %v106, %v103
  %v238 = vpack.c.bf16 %v114, %v111
  %v239 = vpack.c.bf16 %v122, %v119
  %v240 = vpack.c.bf16 %v130, %v127
  %v241 = vpack.c.bf16 %v138, %v135
  %v242 = vpack.c.bf16 %v146, %v143
  %v243 = vpack.c.bf16 %v154, %v151
  %v244 = vpack.c.bf16 %v162, %v159
  %v253 = vunpack.c.l.b16 %v237
  %v254 = vunpack.c.h.b16 %v237
  %v255 = vunpack.c.l.b16 %v238
  %v256 = vunpack.c.h.b16 %v238
  %v257 = vunpack.c.l.b16 %v239
  %v258 = vunpack.c.h.b16 %v239
  %v259 = vunpack.c.l.b16 %v240
  %v260 = vunpack.c.h.b16 %v240
  %v261 = vunpack.c.l.b16 %v241
  %v262 = vunpack.c.h.b16 %v241
  %v263 = vunpack.c.l.b16 %v242
  %v264 = vunpack.c.h.b16 %v242
  %v265 = vunpack.c.l.b16 %v243
  %v266 = vunpack.c.h.b16 %v243
  %v267 = vunpack.c.l.b16 %v244
  %v268 = vunpack.c.h.b16 %v244
  %v269 = vpack.c.b16 %v253, %v253
  %v270 = vpack.c.b16 %v254, %v254
  %v271 = vpack.c.b16 %v255, %v255
  %v272 = vpack.c.b16 %v256, %v256
  %v273 = vpack.c.b16 %v257, %v257
  %v274 = vpack.c.b16 %v258, %v258
  %v275 = vpack.c.b16 %v259, %v259
  %v276 = vpack.c.b16 %v260, %v260
  %v277 = vpack.c.b16 %v261, %v261
  %v278 = vpack.c.b16 %v262, %v262
  %v279 = vpack.c.b16 %v263, %v263
  %v280 = vpack.c.b16 %v264, %v264
  %v281 = vpack.c.b16 %v265, %v265
  %v282 = vpack.c.b16 %v266, %v266
  %v283 = vpack.c.b16 %v267, %v267
  %v284 = vpack.c.b16 %v268, %v268
  %301 = vst [vmem:[%s2] sm:$0xf] %v269
  %302 = vst [vmem:[%s2 + $0x4] sm:$0xf] %v270
  %303 = vst [vmem:[%s2 + $0x8] sm:$0xf] %v271
  %304 = vst [vmem:[%s2 + $0xc] sm:$0xf] %v272
  %305 = vst [vmem:[%s2 + $0x10] sm:$0xf] %v273
  %306 = vst [vmem:[%s2 + $0x14] sm:$0xf] %v274
  %307 = vst [vmem:[%s2 + $0x18] sm:$0xf] %v275
  %308 = vst [vmem:[%s2 + $0x1c] sm:$0xf] %v276
  %309 = vst [vmem:[%s2 + $0x20] sm:$0xf] %v277
  %310 = vst [vmem:[%s2 + $0x24] sm:$0xf] %v278
  %311 = vst [vmem:[%s2 + $0x28] sm:$0xf] %v279
  %312 = vst [vmem:[%s2 + $0x2c] sm:$0xf] %v280
  %313 = vst [vmem:[%s2 + $0x30] sm:$0xf] %v281
  %314 = vst [vmem:[%s2 + $0x34] sm:$0xf] %v282
  %315 = vst [vmem:[%s2 + $0x38] sm:$0xf] %v283
  %316 = vst [vmem:[%s2 + $0x3c] sm:$0xf] %v284
  // Predicated region
  $region18: #{pointnet_sa_msg_forward.9} parent=0 // pred_check
    _
  $region19: #{pointnet_sa_msg_forward.9} parent=0 // pred_check_branch
    %318 = sbr.rel (0) target = $region21
  $region20: #{pointnet_sa_msg_forward.9} parent=0 // pred_region
    _
  $region21: #{pointnet_sa_msg_forward.9} parent=0 // pred_fallthru
    _
  // Predicated region
  $region22: #{pointnet_sa_msg_forward.9} parent=0 // pred_check
    _
  $region23: #{pointnet_sa_msg_forward.9} parent=0 // pred_check_branch
    %320 = sbr.rel (0) target = $region25
  $region24: #{pointnet_sa_msg_forward.9} parent=0 // pred_region
    _
  $region25: #{pointnet_sa_msg_forward.9} parent=0 // pred_fallthru
    _
  // Predicated region
  $region26: #{pointnet_sa_msg_forward.9} parent=0 // pred_check
    _
  $region27: #{pointnet_sa_msg_forward.9} parent=0 // pred_check_branch
    %322 = sbr.rel (0) target = $region29
  $region28: #{pointnet_sa_msg_forward.9} parent=0 // pred_region
    _
  $region29: #{pointnet_sa_msg_forward.9} parent=0 // pred_fallthru
    _
  // Predicated region
  $region30: #{pointnet_sa_msg_forward.9} parent=0 // pred_check
    _
  $region31: #{pointnet_sa_msg_forward.9} parent=0 // pred_check_branch
    %324 = sbr.rel (0) target = $region33
  $region32: #{pointnet_sa_msg_forward.9} parent=0 // pred_region
    _
  $region33: #{pointnet_sa_msg_forward.9} parent=0 // pred_fallthru
    _

// kernel: pointnet_sa_msg_forward.10
$region0: #{pointnet_sa_msg_forward.10}
  #allocation0 [shape = 'u32[]', space=smem, size = 0x4, offset = 0x4, fixed_abs, tag = 'smem constant byte address 0x4 - core index']
  #allocation1 [shape = 'u32[144,128]{1,0:T(1,128)}', space=vmem, size = 0x12000, scoped, tag = 'internal scratch']
  %s0 = inlined_call_operand.vmem [shape: bf16[8,16,128], index: 0, kind: input, shape index: {}]
  %s1 = inlined_call_operand.vmem [shape: f32[2,128], index: 1, kind: input, shape index: {}]
  %s2 = inlined_call_operand.vmem [shape: bf16[128,128], index: 2, kind: input, shape index: {}]
  %s3 = inlined_call_operand.vmem [shape: f32[1,2,128], index: 3, kind: output, shape index: {0}]
  %s4 = inlined_call_operand.vmem [shape: f32[16,128], index: 4, kind: output, shape index: {1}]
  %s5 = inlined_call_operand.vmem [shape: f32[16,128], index: 5, kind: output, shape index: {2}]
  %6 = xla_tuple %s3, %s4, %s5
  %s7 = sld [smem:[#allocation0]]
  $region54: #{pointnet_sa_msg_forward.10} parent=0
    _
  %s9 = ssub.s32 1, %s7
  %s10 = scalar_select 0, %s9, %s7
  // Predicated region
  $region2: #{pointnet_sa_msg_forward.10} parent=0 // pred_check
    _
  $region3: #{pointnet_sa_msg_forward.10} parent=0 // pred_check_branch
    %12 = sbr.rel (0) target = $region5
  $region4: #{pointnet_sa_msg_forward.10} parent=0 // pred_region
    _
  $region5: #{pointnet_sa_msg_forward.10} parent=0 // pred_fallthru
    _
  // Predicated region
  $region6: #{pointnet_sa_msg_forward.10} parent=0 // pred_check
    _
  $region7: #{pointnet_sa_msg_forward.10} parent=0 // pred_check_branch
    %14 = sbr.rel (0) target = $region9
  $region8: #{pointnet_sa_msg_forward.10} parent=0 // pred_region
    _
  $region9: #{pointnet_sa_msg_forward.10} parent=0 // pred_fallthru
    _
  // Predicated region
  $region10: #{pointnet_sa_msg_forward.10} parent=0 // pred_check
    _
  $region11: #{pointnet_sa_msg_forward.10} parent=0 // pred_check_branch
    %16 = sbr.rel (0) target = $region13
  $region12: #{pointnet_sa_msg_forward.10} parent=0 // pred_region
    _
  $region13: #{pointnet_sa_msg_forward.10} parent=0 // pred_fallthru
    _
  %v18 = vld [vmem:[%s0] sm:$0xf]
  %v19 = vld [vmem:[%s0 + $0x4] sm:$0xf]
  %v20 = vld [vmem:[%s0 + $0x8] sm:$0xf]
  %v21 = vld [vmem:[%s0 + $0xc] sm:$0xf]
  %v22 = vld [vmem:[%s0 + $0x10] sm:$0xf]
  %v23 = vld [vmem:[%s0 + $0x14] sm:$0xf]
  %v24 = vld [vmem:[%s0 + $0x18] sm:$0xf]
  %v25 = vld [vmem:[%s0 + $0x1c] sm:$0xf]
  %v26 = vld [vmem:[%s0 + $0x20] sm:$0xf]
  %v27 = vld [vmem:[%s0 + $0x24] sm:$0xf]
  %v28 = vld [vmem:[%s0 + $0x28] sm:$0xf]
  %v29 = vld [vmem:[%s0 + $0x2c] sm:$0xf]
  %v30 = vld [vmem:[%s0 + $0x30] sm:$0xf]
  %v31 = vld [vmem:[%s0 + $0x34] sm:$0xf]
  %v32 = vld [vmem:[%s0 + $0x38] sm:$0xf]
  %v33 = vld [vmem:[%s0 + $0x3c] sm:$0xf]
  %v34 = vld [vmem:[%s1] sm:$0x3]
  %v35 = vunpack.c.l.bf16 %v18
  %v36 = vunpack.c.l.bf16 %v19
  %v37 = vunpack.c.l.bf16 %v20
  %v38 = vunpack.c.l.bf16 %v21
  %v39 = vunpack.c.l.bf16 %v22
  %v40 = vunpack.c.l.bf16 %v23
  %v41 = vunpack.c.l.bf16 %v24
  %v42 = vunpack.c.l.bf16 %v25
  %v43 = vunpack.c.l.bf16 %v26
  %v44 = vunpack.c.l.bf16 %v27
  %v45 = vunpack.c.l.bf16 %v28
  %v46 = vunpack.c.l.bf16 %v29
  %v47 = vunpack.c.l.bf16 %v30
  %v48 = vunpack.c.l.bf16 %v31
  %v49 = vunpack.c.l.bf16 %v32
  %v50 = vunpack.c.l.bf16 %v33
  %v51 = vlaneseq
  %v52 = vshrl.u32 %v51, 7
  %v53 = vsub.s32 0, %v52
  %v54 = vrot.slane %v34, %v53
  %v55 = vmul.f32 %v35, %v54
  %v56 = vmul.f32 %v36, %v54
  %v57 = vmul.f32 %v37, %v54
  %v58 = vmul.f32 %v38, %v54
  %v59 = vmul.f32 %v39, %v54
  %v60 = vmul.f32 %v40, %v54
  %v61 = vmul.f32 %v41, %v54
  %v62 = vmul.f32 %v42, %v54
  %v63 = vmul.f32 %v43, %v54
  %v64 = vmul.f32 %v44, %v54
  %v65 = vmul.f32 %v45, %v54
  %v66 = vmul.f32 %v46, %v54
  %v67 = vmul.f32 %v47, %v54
  %v68 = vmul.f32 %v48, %v54
  %v69 = vmul.f32 %v49, %v54
  %v70 = vmul.f32 %v50, %v54
  %v71 = vlaneseq
  %v72 = vshrl.u32 %v71, 7
  %v73 = vsub.s32 1, %v72
  %v74 = vrot.slane %v34, %v73
  %v75 = vadd.f32 %v55, %v74
  %v76 = vadd.f32 %v56, %v74
  %v77 = vadd.f32 %v57, %v74
  %v78 = vadd.f32 %v58, %v74
  %v79 = vadd.f32 %v59, %v74
  %v80 = vadd.f32 %v60, %v74
  %v81 = vadd.f32 %v61, %v74
  %v82 = vadd.f32 %v62, %v74
  %v83 = vadd.f32 %v63, %v74
  %v84 = vadd.f32 %v64, %v74
  %v85 = vadd.f32 %v65, %v74
  %v86 = vadd.f32 %v66, %v74
  %v87 = vadd.f32 %v67, %v74
  %v88 = vadd.f32 %v68, %v74
  %v89 = vadd.f32 %v69, %v74
  %v90 = vadd.f32 %v70, %v74
  %v91 = vmax.f32 %v75, 0.0
  %v92 = vmax.f32 %v76, 0.0
  %v93 = vmax.f32 %v77, 0.0
  %v94 = vmax.f32 %v78, 0.0
  %v95 = vmax.f32 %v79, 0.0
  %v96 = vmax.f32 %v80, 0.0
  %v97 = vmax.f32 %v81, 0.0
  %v98 = vmax.f32 %v82, 0.0
  %v99 = vmax.f32 %v83, 0.0
  %v100 = vmax.f32 %v84, 0.0
  %v101 = vmax.f32 %v85, 0.0
  %v102 = vmax.f32 %v86, 0.0
  %v103 = vmax.f32 %v87, 0.0
  %v104 = vmax.f32 %v88, 0.0
  %v105 = vmax.f32 %v89, 0.0
  %v106 = vmax.f32 %v90, 0.0
  %v107 = vpack.c.bf16 %v92, %v91
  %v108 = vpack.c.bf16 %v94, %v93
  %v109 = vpack.c.bf16 %v96, %v95
  %v110 = vpack.c.bf16 %v98, %v97
  %v111 = vpack.c.bf16 %v100, %v99
  %v112 = vpack.c.bf16 %v102, %v101
  %v113 = vpack.c.bf16 %v104, %v103
  %v114 = vpack.c.bf16 %v106, %v105
  %v115 = vld [vmem:[%s2] sm:$0xf]
  %v116 = vld [vmem:[%s2 + $0x4] sm:$0xf]
  %v117 = vld [vmem:[%s2 + $0x8] sm:$0xf]
  %v118 = vld [vmem:[%s2 + $0xc] sm:$0xf]
  %v119 = vld [vmem:[%s2 + $0x10] sm:$0xf]
  %v120 = vld [vmem:[%s2 + $0x14] sm:$0xf]
  %v121 = vld [vmem:[%s2 + $0x18] sm:$0xf]
  %v122 = vld [vmem:[%s2 + $0x1c] sm:$0xf]
  %v123 = vld [vmem:[%s2 + $0x20] sm:$0xf]
  %v124 = vld [vmem:[%s2 + $0x24] sm:$0xf]
  %v125 = vld [vmem:[%s2 + $0x28] sm:$0xf]
  %v126 = vld [vmem:[%s2 + $0x2c] sm:$0xf]
  %v127 = vld [vmem:[%s2 + $0x30] sm:$0xf]
  %v128 = vld [vmem:[%s2 + $0x34] sm:$0xf]
  %v129 = vld [vmem:[%s2 + $0x38] sm:$0xf]
  %v130 = vld [vmem:[%s2 + $0x3c] sm:$0xf]
  %v147 = vunpack.c.l.b16 %v115
  %v148 = vunpack.c.l.b16 %v116
  %v149 = vunpack.c.l.b16 %v117
  %v150 = vunpack.c.l.b16 %v118
  %v151 = vunpack.c.l.b16 %v119
  %v152 = vunpack.c.l.b16 %v120
  %v153 = vunpack.c.l.b16 %v121
  %v154 = vunpack.c.l.b16 %v122
  %v155 = vunpack.c.l.b16 %v123
  %v156 = vunpack.c.l.b16 %v124
  %v157 = vunpack.c.l.b16 %v125
  %v158 = vunpack.c.l.b16 %v126
  %v159 = vunpack.c.l.b16 %v127
  %v160 = vunpack.c.l.b16 %v128
  %v161 = vunpack.c.l.b16 %v129
  %v162 = vunpack.c.l.b16 %v130
  %v163 = vpack.c.b16 %v148, %v147
  %v164 = vpack.c.b16 %v150, %v149
  %v165 = vpack.c.b16 %v152, %v151
  %v166 = vpack.c.b16 %v154, %v153
  %v167 = vpack.c.b16 %v156, %v155
  %v168 = vpack.c.b16 %v158, %v157
  %v169 = vpack.c.b16 %v160, %v159
  %v170 = vpack.c.b16 %v162, %v161
  %179 = vmatprep.subr.bf16.mxu0 0
  %180 = vmatpush1.bf16.msra.mxu0 %v163
  %181 = vmatprep.subr.bf16.mxu0 0
  %182 = vmatpush1.bf16.msra.mxu0 %v164
  %183 = vmatprep.subr.bf16.mxu0 0
  %184 = vmatpush1.bf16.msra.mxu0 %v165
  %185 = vmatprep.subr.bf16.mxu0 0
  %186 = vmatpush1.bf16.msra.mxu0 %v166
  %187 = vmatprep.subr.bf16.mxu0 0
  %188 = vmatpush1.bf16.msra.mxu0 %v167
  %189 = vmatprep.subr.bf16.mxu0 0
  %190 = vmatpush1.bf16.msra.mxu0 %v168
  %191 = vmatprep.subr.bf16.mxu0 0
  %192 = vmatpush1.bf16.msra.mxu0 %v169
  %193 = vmatprep.subr.bf16.mxu0 0
  %194 = vmatpush1.bf16.msra.mxu0 %v170
  %195 = vmatprep.subr.bf16.mxu0 0
  %196 = vmatpush1.bf16.msra.mxu0 0
  %197 = vmatprep.subr.bf16.mxu0 0
  %198 = vmatpush1.bf16.msra.mxu0 0
  %199 = vmatprep.subr.bf16.mxu0 0
  %200 = vmatpush1.bf16.msra.mxu0 0
  %201 = vmatprep.subr.bf16.mxu0 0
  %202 = vmatpush1.bf16.msra.mxu0 0
  %203 = vmatprep.subr.bf16.mxu0 0
  %204 = vmatpush1.bf16.msra.mxu0 0
  %205 = vmatprep.subr.bf16.mxu0 0
  %206 = vmatpush1.bf16.msra.mxu0 0
  %207 = vmatprep.subr.bf16.mxu0 0
  %208 = vmatpush1.bf16.msra.mxu0 0
  %209 = vmatprep.subr.bf16.mxu0 0
  %210 = vmatpush1.bf16.msra.mxu0 0
  %211 = vmatprep.mubr.bf16.mxu0 0
  %212 = vmatmul.mubr.bf16.gmra.mrb[0].mxu0 %v107
  %v213 = vpop.f32.mrb[0].mxu0
  %v214 = vadd.f32 0.0, %v213
  %v215 = vpop.f32.mrb[0].mxu0
  %v216 = vpop.f32.mrb[0].mxu0
  %v217 = vadd.f32 0.0, %v216
  %v218 = vpop.f32.mrb[0].mxu0
  %219 = vmatprep.mubr.bf16.mxu0 0
  %220 = vmatmul.mubr.bf16.gmra.mrb[0].mxu0 %v108
  %v221 = vpop.f32.mrb[0].mxu0
  %v222 = vadd.f32 0.0, %v221
  %v223 = vpop.f32.mrb[0].mxu0
  %v224 = vpop.f32.mrb[0].mxu0
  %v225 = vadd.f32 0.0, %v224
  %v226 = vpop.f32.mrb[0].mxu0
  %227 = vmatprep.mubr.bf16.mxu0 0
  %228 = vmatmul.mubr.bf16.gmra.mrb[0].mxu0 %v109
  %v229 = vpop.f32.mrb[0].mxu0
  %v230 = vadd.f32 0.0, %v229
  %v231 = vpop.f32.mrb[0].mxu0
  %v232 = vpop.f32.mrb[0].mxu0
  %v233 = vadd.f32 0.0, %v232
  %v234 = vpop.f32.mrb[0].mxu0
  %235 = vmatprep.mubr.bf16.mxu0 0
  %236 = vmatmul.mubr.bf16.gmra.mrb[0].mxu0 %v110
  %v237 = vpop.f32.mrb[0].mxu0
  %v238 = vadd.f32 0.0, %v237
  %v239 = vpop.f32.mrb[0].mxu0
  %v240 = vpop.f32.mrb[0].mxu0
  %v241 = vadd.f32 0.0, %v240
  %v242 = vpop.f32.mrb[0].mxu0
  %243 = vmatprep.mubr.bf16.mxu0 0
  %244 = vmatmul.mubr.bf16.gmra.mrb[0].mxu0 %v111
  %v245 = vpop.f32.mrb[0].mxu0
  %v246 = vadd.f32 0.0, %v245
  %v247 = vpop.f32.mrb[0].mxu0
  %v248 = vpop.f32.mrb[0].mxu0
  %v249 = vadd.f32 0.0, %v248
  %v250 = vpop.f32.mrb[0].mxu0
  %251 = vmatprep.mubr.bf16.mxu0 0
  %252 = vmatmul.mubr.bf16.gmra.mrb[0].mxu0 %v112
  %v253 = vpop.f32.mrb[0].mxu0
  %v254 = vadd.f32 0.0, %v253
  %v255 = vpop.f32.mrb[0].mxu0
  %v256 = vpop.f32.mrb[0].mxu0
  %v257 = vadd.f32 0.0, %v256
  %v258 = vpop.f32.mrb[0].mxu0
  %259 = vmatprep.mubr.bf16.mxu0 0
  %260 = vmatmul.mubr.bf16.gmra.mrb[0].mxu0 %v113
  %v261 = vpop.f32.mrb[0].mxu0
  %v262 = vadd.f32 0.0, %v261
  %v263 = vpop.f32.mrb[0].mxu0
  %v264 = vpop.f32.mrb[0].mxu0
  %v265 = vadd.f32 0.0, %v264
  %v266 = vpop.f32.mrb[0].mxu0
  %267 = vmatprep.mubr.bf16.mxu0 0
  %268 = vmatmul.mubr.bf16.gmra.mrb[0].mxu0 %v114
  %v269 = vpop.f32.mrb[0].mxu0
  %v270 = vadd.f32 0.0, %v269
  %v271 = vpop.f32.mrb[0].mxu0
  %v272 = vpop.f32.mrb[0].mxu0
  %v273 = vadd.f32 0.0, %v272
  %v274 = vpop.f32.mrb[0].mxu0
  %275 = vdwg.mxu0
  %v276 = vadd.f32 %v214, %v222
  %v277 = vadd.f32 %v276, %v230
  %v278 = vadd.f32 %v277, %v238
  %v279 = vadd.f32 %v278, %v246
  %v280 = vadd.f32 %v279, %v254
  %v281 = vadd.f32 %v280, %v262
  %v282 = vadd.f32 %v281, %v270
  %v283 = vadd.f32 %v217, %v225
  %v284 = vadd.f32 %v283, %v233
  %v285 = vadd.f32 %v284, %v241
  %v286 = vadd.f32 %v285, %v249
  %v287 = vadd.f32 %v286, %v257
  %v288 = vadd.f32 %v287, %v265
  %v289 = vadd.f32 %v288, %v273
  %v290 = vadd.f32 %v282, %v289
  %v291 = vrot.slane %v290, 4
  %v292 = vadd.f32 %v290, %v291
  %v293 = vrot.slane %v292, 2
  %v294 = vadd.f32 %v292, %v293
  %v295 = vrot.slane %v294, 1
  %v296 = vadd.f32 %v294, %v295
  %v297 = vmul.f32 %v214, %v214
  %v298 = vmul.f32 %v217, %v217
  %v299 = vmul.f32 %v222, %v222
  %v300 = vmul.f32 %v225, %v225
  %v301 = vmul.f32 %v230, %v230
  %v302 = vmul.f32 %v233, %v233
  %v303 = vmul.f32 %v238, %v238
  %v304 = vmul.f32 %v241, %v241
  %v305 = vmul.f32 %v246, %v246
  %v306 = vmul.f32 %v249, %v249
  %v307 = vmul.f32 %v254, %v254
  %v308 = vmul.f32 %v257, %v257
  %v309 = vmul.f32 %v262, %v262
  %v310 = vmul.f32 %v265, %v265
  %v311 = vmul.f32 %v270, %v270
  %v312 = vmul.f32 %v273, %v273
  %v313 = vadd.f32 %v297, %v299
  %v314 = vadd.f32 %v313, %v301
  %v315 = vadd.f32 %v314, %v303
  %v316 = vadd.f32 %v315, %v305
  %v317 = vadd.f32 %v316, %v307
  %v318 = vadd.f32 %v317, %v309
  %v319 = vadd.f32 %v318, %v311
  %v320 = vadd.f32 %v298, %v300
  %v321 = vadd.f32 %v320, %v302
  %v322 = vadd.f32 %v321, %v304
  %v323 = vadd.f32 %v322, %v306
  %v324 = vadd.f32 %v323, %v308
  %v325 = vadd.f32 %v324, %v310
  %v326 = vadd.f32 %v325, %v312
  %v327 = vadd.f32 %v319, %v326
  %v328 = vrot.slane %v327, 4
  %v329 = vadd.f32 %v327, %v328
  %v330 = vrot.slane %v329, 2
  %v331 = vadd.f32 %v329, %v330
  %v332 = vrot.slane %v331, 1
  %v333 = vadd.f32 %v331, %v332
  %vm334 = vcmask 1040384
  %v335 = vsel %vm334, %v296, %v333
  %p336 = scmp.eq.s32.totalorder 0, 0
  // Predicated region
  $region14: #{pointnet_sa_msg_forward.10} parent=0 // pred_check
    %p337 = pneg %p336
  $region15: #{pointnet_sa_msg_forward.10} parent=0 // pred_check_branch
    %339 = sbr.rel (%p337) target = $region17
  $region16: #{pointnet_sa_msg_forward.10} parent=0 // pred_region
    %340 = vst [vmem:[%s3] sm:$0x3] %v335
  $region17: #{pointnet_sa_msg_forward.10} parent=0 // pred_fallthru
    _
  %p341 = scmp.ne.s32.totalorder 0, 0
  // Predicated region
  $region18: #{pointnet_sa_msg_forward.10} parent=0 // pred_check
    %p342 = pneg %p341
  $region19: #{pointnet_sa_msg_forward.10} parent=0 // pred_check_branch
    %344 = sbr.rel (%p342) target = $region21
  $region20: #{pointnet_sa_msg_forward.10} parent=0 // pred_region
    %v345 = vld [vmem:[%s3] sm:$0x3]
    %v346 = vadd.f32 %v345, %v335
    %347 = vst [vmem:[%s3] sm:$0x3] %v346
  $region21: #{pointnet_sa_msg_forward.10} parent=0 // pred_fallthru
    _
  %v348 = vmax.f32 %v214, %v230
  %v349 = vmax.f32 %v222, %v238
  %v350 = vmax.f32 %v348, %v246
  %v351 = vmax.f32 %v349, %v254
  %v352 = vmax.f32 %v350, %v262
  %v353 = vmax.f32 %v351, %v270
  %v354 = vmax.f32 %v352, %v353
  %v355 = vmax.f32 %v217, %v233
  %v356 = vmax.f32 %v225, %v241
  %v357 = vmax.f32 %v355, %v249
  %v358 = vmax.f32 %v356, %v257
  %v359 = vmax.f32 %v357, %v265
  %v360 = vmax.f32 %v358, %v273
  %v361 = vmax.f32 %v359, %v360
  %v362 = vmin.f32 %v214, %v230
  %v363 = vmin.f32 %v222, %v238
  %v364 = vmin.f32 %v362, %v246
  %v365 = vmin.f32 %v363, %v254
  %v366 = vmin.f32 %v364, %v262
  %v367 = vmin.f32 %v365, %v270
  %v368 = vmin.f32 %v366, %v367
  %v369 = vmin.f32 %v217, %v233
  %v370 = vmin.f32 %v225, %v241
  %v371 = vmin.f32 %v369, %v249
  %v372 = vmin.f32 %v370, %v257
  %v373 = vmin.f32 %v371, %v265
  %v374 = vmin.f32 %v372, %v273
  %v375 = vmin.f32 %v373, %v374
  // Predicated region
  $region22: #{pointnet_sa_msg_forward.10} parent=0 // pred_check
    %p376 = pneg %p336
  $region23: #{pointnet_sa_msg_forward.10} parent=0 // pred_check_branch
    %378 = sbr.rel (%p376) target = $region25
  $region24: #{pointnet_sa_msg_forward.10} parent=0 // pred_region
    %379 = vst [vmem:[%s4] sm:$0xff] %v354
    %380 = vst [vmem:[%s4 + $0x8] sm:$0xff] %v361
    %381 = vst [vmem:[%s5] sm:$0xff] %v368
    %382 = vst [vmem:[%s5 + $0x8] sm:$0xff] %v375
  $region25: #{pointnet_sa_msg_forward.10} parent=0 // pred_fallthru
    _
  // Predicated region
  $region26: #{pointnet_sa_msg_forward.10} parent=0 // pred_check
    %p383 = pneg %p341
  $region27: #{pointnet_sa_msg_forward.10} parent=0 // pred_check_branch
    %385 = sbr.rel (%p383) target = $region29
  $region28: #{pointnet_sa_msg_forward.10} parent=0 // pred_region
    %v386 = vld [vmem:[%s4] sm:$0xff]
    %v387 = vld [vmem:[%s4 + $0x8] sm:$0xff]
    %v388 = vmax.f32 %v386, %v354
    %v389 = vmax.f32 %v387, %v361
    %390 = vst [vmem:[%s4] sm:$0xff] %v388
    %391 = vst [vmem:[%s4 + $0x8] sm:$0xff] %v389
    %v392 = vld [vmem:[%s5] sm:$0xff]
    %v393 = vld [vmem:[%s5 + $0x8] sm:$0xff]
    %v394 = vmin.f32 %v392, %v368
    %v395 = vmin.f32 %v393, %v375
    %396 = vst [vmem:[%s5] sm:$0xff] %v394
    %397 = vst [vmem:[%s5 + $0x8] sm:$0xff] %v395
  $region29: #{pointnet_sa_msg_forward.10} parent=0 // pred_fallthru
    _
  // Predicated region
  $region30: #{pointnet_sa_msg_forward.10} parent=0 // pred_check
    _
  $region31: #{pointnet_sa_msg_forward.10} parent=0 // pred_check_branch
    %399 = sbr.rel (0) target = $region33
  $region32: #{pointnet_sa_msg_forward.10} parent=0 // pred_region
    _
  $region33: #{pointnet_sa_msg_forward.10} parent=0 // pred_fallthru
    _
  // Predicated region
  $region34: #{pointnet_sa_msg_forward.10} parent=0 // pred_check
    _
  $region35: #{pointnet_sa_msg_forward.10} parent=0 // pred_check_branch
    %401 = sbr.rel (0) target = $region37
  $region36: #{pointnet_sa_msg_forward.10} parent=0 // pred_region
    _
  $region37: #{pointnet_sa_msg_forward.10} parent=0 // pred_fallthru
    _
  // Predicated region
  $region38: #{pointnet_sa_msg_forward.10} parent=0 // pred_check
    _
  $region39: #{pointnet_sa_msg_forward.10} parent=0 // pred_check_branch
    %403 = sbr.rel (0) target = $region41
  $region40: #{pointnet_sa_msg_forward.10} parent=0 // pred_region
    _
  $region41: #{pointnet_sa_msg_forward.10} parent=0 // pred_fallthru
    _
  // Predicated region
  $region42: #{pointnet_sa_msg_forward.10} parent=0 // pred_check
    _
  $region43: #{pointnet_sa_msg_forward.10} parent=0 // pred_check_branch
    %405 = sbr.rel (0) target = $region45
  $region44: #{pointnet_sa_msg_forward.10} parent=0 // pred_region
    _
  $region45: #{pointnet_sa_msg_forward.10} parent=0 // pred_fallthru
    _
  // Predicated region
  $region46: #{pointnet_sa_msg_forward.10} parent=0 // pred_check
    _
  $region47: #{pointnet_sa_msg_forward.10} parent=0 // pred_check_branch
    %407 = sbr.rel (0) target = $region49
  $region48: #{pointnet_sa_msg_forward.10} parent=0 // pred_region
    _
  $region49: #{pointnet_sa_msg_forward.10} parent=0 // pred_fallthru
    _
  // Predicated region
  $region50: #{pointnet_sa_msg_forward.10} parent=0 // pred_check
    _
  $region51: #{pointnet_sa_msg_forward.10} parent=0 // pred_check_branch
    %409 = sbr.rel (0) target = $region53
  $region52: #{pointnet_sa_msg_forward.10} parent=0 // pred_region
    _
  $region53: #{pointnet_sa_msg_forward.10} parent=0 // pred_fallthru
    _

</llo_original>
